<compile_context>
chip_gen: v7x
topology: tpu7x:2x2x1
jax: 0.10.0
libtpu: 0.0.40
codegen_flags: <defaults>
</compile_context>

<pallas_src>
import jax
import jax.numpy as jnp
from jax.experimental import pallas as pl
from jax.experimental.pallas import tpu as pltpu


def _round_up(n: int, m: int) -> int:
    return ((n + m - 1) // m) * m


def _mlp_kernel(x_ref, w1_ref, b1_ref, w2_ref, b2_ref, o_ref):
    # fc1: [TB, In] @ [In, H] -> f32 accumulator, bias + ReLU in f32.
    h = jnp.dot(x_ref[...], w1_ref[...], preferred_element_type=jnp.float32)
    h = jnp.maximum(h + b1_ref[...], 0.0)
    # fc2: [TB, H] @ [H, C] -> f32 accumulator, bias in f32.
    out = jnp.dot(h.astype(w2_ref.dtype), w2_ref[...],
                  preferred_element_type=jnp.float32)
    o_ref[...] = (out + b2_ref[...]).astype(o_ref.dtype)


def neural_net_forward(x, w1, b1, w2, b2, *, tb=128):
    """Pallas forward pass: fc1 -> ReLU -> fc2.

    x:  [B, In]  float32
    w1: [In, H], b1: [1, H]   (weights are PyTorch weight.T, i.e. [in, out])
    w2: [H, C],  b2: [1, C]
    returns [B, C] float32
    """
    B, In = x.shape
    H = w1.shape[1]
    C = w2.shape[1]

    # Pad every matmul/lane dimension to a multiple of 128 and the batch to a
    # multiple of the batch tile. Zero padding is exact: padded input columns
    # hit zero weight rows, padded hidden units are ReLU(0)=0, padded class
    # columns are sliced off below.
    Inp = _round_up(In, 128)
    Hp = _round_up(H, 128)
    Cp = _round_up(C, 128)
    Bp = _round_up(B, tb)

    x_p = jnp.pad(x, ((0, Bp - B), (0, Inp - In))).astype(jnp.bfloat16)
    w1_p = jnp.pad(w1, ((0, Inp - In), (0, Hp - H))).astype(jnp.bfloat16)
    b1_p = jnp.pad(b1, ((0, 0), (0, Hp - H))).astype(jnp.float32)
    w2_p = jnp.pad(w2, ((0, Hp - H), (0, Cp - C))).astype(jnp.bfloat16)
    b2_p = jnp.pad(b2, ((0, 0), (0, Cp - C))).astype(jnp.float32)

    grid = (Bp // tb,)
    out_padded = pl.pallas_call(
        _mlp_kernel,
        out_shape=jax.ShapeDtypeStruct((Bp, Cp), jnp.float32),
        grid_spec=pl.GridSpec(
            grid=grid,
            in_specs=[
                pl.BlockSpec((tb, Inp), lambda i: (i, 0)),   # x: streamed per tile
                pl.BlockSpec((Inp, Hp), lambda i: (0, 0)),   # w1: resident
                pl.BlockSpec((1, Hp), lambda i: (0, 0)),     # b1: resident
                pl.BlockSpec((Hp, Cp), lambda i: (0, 0)),    # w2: resident
                pl.BlockSpec((1, Cp), lambda i: (0, 0)),     # b2: resident
            ],
            out_specs=pl.BlockSpec((tb, Cp), lambda i: (i, 0)),
        ),
        compiler_params=pltpu.CompilerParams(
            dimension_semantics=("parallel",)),
    )(x_p, w1_p, b1_p, w2_p, b2_p)

    return out_padded[:B, :C]


def init_params(key, input_size, hidden_size, num_classes):
    """Deterministic init mirroring nn.Linear defaults (U(-1/sqrt(fan_in), ...))."""
    k1, k2, k3, k4 = jax.random.split(key, 4)
    bound1 = 1.0 / jnp.sqrt(input_size)
    bound2 = 1.0 / jnp.sqrt(hidden_size)
    # Stored as [in, out] (transpose of PyTorch's [out, in]) for x @ W.
    w1 = jax.random.uniform(k1, (input_size, hidden_size), jnp.float32,
                            -bound1, bound1)
    b1 = jax.random.uniform(k2, (1, hidden_size), jnp.float32, -bound1, bound1)
    w2 = jax.random.uniform(k3, (hidden_size, num_classes), jnp.float32,
                            -bound2, bound2)
    b2 = jax.random.uniform(k4, (1, num_classes), jnp.float32, -bound2, bound2)
    return w1, b1, w2, b2


if __name__ == "__main__":
    # MNIST-like shapes: batch=256 (>=128 so the MXU rows are actually used),
    # input=784, hidden=128, classes=10.
    B, INPUT, HIDDEN, CLASSES = 256, 784, 128, 10
    key = jax.random.PRNGKey(0)
    kx, kp = jax.random.split(key)
    x = jax.random.normal(kx, (B, INPUT), jnp.float32)
    w1, b1, w2, b2 = init_params(kp, INPUT, HIDDEN, CLASSES)

    out = neural_net_forward(x, w1, b1, w2, b2)
    jax.block_until_ready(out)

    # Pure-JAX reference mirroring the kernel's bf16 matmul inputs with f32
    # accumulation (tolerance loosened accordingly).
    xb = x.astype(jnp.bfloat16)
    w1b = w1.astype(jnp.bfloat16)
    w2b = w2.astype(jnp.bfloat16)
    h_ref = jnp.maximum(
        jnp.dot(xb, w1b, preferred_element_type=jnp.float32) + b1, 0.0)
    ref = jnp.dot(h_ref.astype(jnp.bfloat16), w2b,
                  preferred_element_type=jnp.float32) + b2

    assert out.shape == (B, CLASSES)
    assert jnp.allclose(out, ref, atol=1e-2, rtol=1e-2)

    print("KERNEL_OK")
</pallas_src>

<mosaic_0001>
module attributes {stable_mosaic.version = 11 : i64} {
  func.func @_mlp_kernel(%arg0: i32, %arg1: memref<128x896xbf16, #tpu.memory_space<vmem>>, %arg2: memref<896x128xbf16, #tpu.memory_space<vmem>>, %arg3: memref<1x128xf32, #tpu.memory_space<vmem>>, %arg4: memref<128x128xbf16, #tpu.memory_space<vmem>>, %arg5: memref<1x128xf32, #tpu.memory_space<vmem>>, %arg6: memref<128x128xf32, #tpu.memory_space<vmem>>) attributes {dimension_semantics = [#tpu.dimension_semantics<parallel>], iteration_bounds = array<i64: 2>, scalar_prefetch = 0 : i64, scratch_operands = 0 : i64, tpu.core_type = #tpu.core_type<tc>, window_params = [{transform_indices = @transform_0, window_bounds = array<i64: 128, 896>}, {pipeline_mode = #tpu.pipeline_mode<synchronous>, transform_indices = @transform_1, window_bounds = array<i64: 896, 128>}, {pipeline_mode = #tpu.pipeline_mode<synchronous>, transform_indices = @transform_2, window_bounds = array<i64: 1, 128>}, {pipeline_mode = #tpu.pipeline_mode<synchronous>, transform_indices = @transform_3, window_bounds = array<i64: 128, 128>}, {pipeline_mode = #tpu.pipeline_mode<synchronous>, transform_indices = @transform_4, window_bounds = array<i64: 1, 128>}, {transform_indices = @transform_5, window_bounds = array<i64: 128, 128>}]} {
    %c0 = arith.constant 0 : index
    %c0_0 = arith.constant 0 : index
    %0 = vector.load %arg1[%c0, %c0_0] : memref<128x896xbf16, #tpu.memory_space<vmem>>, vector<128x896xbf16>
    %c0_1 = arith.constant 0 : index
    %c0_2 = arith.constant 0 : index
    %1 = vector.load %arg2[%c0_1, %c0_2] : memref<896x128xbf16, #tpu.memory_space<vmem>>, vector<896x128xbf16>
    %cst = arith.constant dense<0.000000e+00> : vector<128x128xf32>
    %2 = tpu.matmul %0, %1, %cst {dimension_numbers = #tpu.dot_dimension_numbers<[1], [0], [0], [1], [0, 0, 1, 1], [], []>} : vector<128x896xbf16>, vector<896x128xbf16>, vector<128x128xf32> -> vector<128x128xf32>
    %c0_3 = arith.constant 0 : index
    %c0_4 = arith.constant 0 : index
    %3 = vector.load %arg3[%c0_3, %c0_4] : memref<1x128xf32, #tpu.memory_space<vmem>>, vector<1x128xf32>
    %4 = vector.broadcast %3 : vector<1x128xf32> to vector<128x128xf32>
    %5 = arith.addf %2, %4 : vector<128x128xf32>
    %cst_5 = arith.constant 0.000000e+00 : f32
    %6 = vector.broadcast %cst_5 : f32 to vector<128x128xf32>
    %7 = arith.maximumf %5, %6 : vector<128x128xf32>
    %8 = arith.truncf %7 : vector<128x128xf32> to vector<128x128xbf16>
    %c0_6 = arith.constant 0 : index
    %c0_7 = arith.constant 0 : index
    %9 = vector.load %arg4[%c0_6, %c0_7] : memref<128x128xbf16, #tpu.memory_space<vmem>>, vector<128x128xbf16>
    %cst_8 = arith.constant dense<0.000000e+00> : vector<128x128xf32>
    %10 = tpu.matmul %8, %9, %cst_8 {dimension_numbers = #tpu.dot_dimension_numbers<[1], [0], [0], [1], [0, 0, 1, 1], [], []>} : vector<128x128xbf16>, vector<128x128xbf16>, vector<128x128xf32> -> vector<128x128xf32>
    %c0_9 = arith.constant 0 : index
    %c0_10 = arith.constant 0 : index
    %11 = vector.load %arg5[%c0_9, %c0_10] : memref<1x128xf32, #tpu.memory_space<vmem>>, vector<1x128xf32>
    %12 = vector.broadcast %11 : vector<1x128xf32> to vector<128x128xf32>
    %13 = arith.addf %10, %12 : vector<128x128xf32>
    %c0_11 = arith.constant 0 : index
    %c0_12 = arith.constant 0 : index
    %14 = vector.load %arg6[%c0_11, %c0_12] : memref<128x128xf32, #tpu.memory_space<vmem>>, vector<128x128xf32>
    tpu.vector_store %arg6[%c0_11, %c0_12], %13 {strides = array<i32>} : memref<128x128xf32, #tpu.memory_space<vmem>>, vector<128x128xf32>,
    return
  }
  func.func @transform_0(%arg0: i32) -> (i32, i32) {
    %c0_i32 = arith.constant 0 : i32
    %c0_i32_0 = arith.constant 0 : i32
    return %arg0, %c0_i32 : i32, i32
  }
  func.func @transform_1(%arg0: i32) -> (i32, i32) {
    %c0_i32 = arith.constant 0 : i32
    %c0_i32_0 = arith.constant 0 : i32
    %c0_i32_1 = arith.constant 0 : i32
    return %c0_i32, %c0_i32_0 : i32, i32
  }
  func.func @transform_2(%arg0: i32) -> (i32, i32) {
    %c0_i32 = arith.constant 0 : i32
    %c0_i32_0 = arith.constant 0 : i32
    %c0_i32_1 = arith.constant 0 : i32
    return %c0_i32, %c0_i32_0 : i32, i32
  }
  func.func @transform_3(%arg0: i32) -> (i32, i32) {
    %c0_i32 = arith.constant 0 : i32
    %c0_i32_0 = arith.constant 0 : i32
    %c0_i32_1 = arith.constant 0 : i32
    return %c0_i32, %c0_i32_0 : i32, i32
  }
  func.func @transform_4(%arg0: i32) -> (i32, i32) {
    %c0_i32 = arith.constant 0 : i32
    %c0_i32_0 = arith.constant 0 : i32
    %c0_i32_1 = arith.constant 0 : i32
    return %c0_i32, %c0_i32_0 : i32, i32
  }
  func.func @transform_5(%arg0: i32) -> (i32, i32) {
    %c0_i32 = arith.constant 0 : i32
    %c0_i32_0 = arith.constant 0 : i32
    return %arg0, %c0_i32 : i32, i32
  }
}

</mosaic_0001>

<llo_original>
// kernel: tpu_custom_call.1
$region0: #{tpu_custom_call.1}
  #allocation0 [shape = 'u32[]', space=smem, size = 0x4, offset = 0x4, fixed_abs, tag = 'smem constant byte address 0x4 - core index']
  #allocation1 [shape = 'u32[144,128]{1,0:T(1,128)}', space=vmem, size = 0x12000, scoped, tag = 'internal scratch']
  %s0 = inlined_call_operand.hbm [shape: bf16[256,896], index: 0, kind: input, shape index: {}]
  %s1 = inlined_call_operand.hbm [shape: bf16[896,128], index: 1, kind: input, shape index: {}]
  %s2 = inlined_call_operand.vmem [shape: f32[1,128], index: 2, kind: input, shape index: {}]
  %s3 = inlined_call_operand.hbm [shape: bf16[128,128], index: 3, kind: input, shape index: {}]
  %s4 = inlined_call_operand.vmem [shape: f32[1,128], index: 4, kind: input, shape index: {}]
  %s5 = inlined_call_operand.hbm [shape: f32[256,128], index: 5, kind: output, shape index: {}]
  %s6 = sld [smem:[#allocation0]]
  $region65: #{tpu_custom_call.1} parent=0
    _
  %s8 = ssub.s32 1, %s6
  %s9 = scalar_select 0, %s8, %s6
  $region1: #{tpu_custom_call.1} parent=0
    #allocation2 [shape = 'u8[458752]{0}', space=vmem, size = 0x70000, scoped, tag = 'input window, operand 0']
    #allocation3 [shape = 's32[2]{0}', space=sflag, size = 0x8, scoped, tag = 'scoped memory for tpu_custom_call.1']
    #allocation4 [shape = 's32[2]{0}', space=sflag, size = 0x8, scoped, tag = 'scoped memory for tpu_custom_call.1']
    #allocation5 [shape = 'u8[229376]{0}', space=vmem, size = 0x38000, scoped, tag = 'input window, operand 1, single buffered']
    #allocation6 [shape = 's32[1]{0}', space=sflag, size = 0x4, scoped, tag = 'scoped memory for tpu_custom_call.1']
    #allocation7 [shape = 'u8[32768]{0}', space=vmem, size = 0x8000, scoped, tag = 'input window, operand 3, single buffered']
    #allocation8 [shape = 'u8[131072]{0}', space=vmem, size = 0x20000, scoped, tag = 'output window, operand 0']
    %10 = vsyncpa [#allocation3], 0
    %s11 = scalar_lea.sflag [#allocation3], 1
    %12 = vsyncpa %s11, 0
    %13 = vsyncpa [#allocation6], 0
    %14 = vsyncpa [#allocation4], 0
    %s15 = scalar_lea.sflag [#allocation4], 1
    %16 = vsyncpa %s15, 0
    loop: start=0, step=1, limit=4
    $region2: #{tpu_custom_call.1} parent=1 // loop_pre_header
      _
    $region3: #{tpu_custom_call.1} parent=1 // loop_header
      %s18 = sphi 0, %s22
      %p19 = scmp.ge.s32.totalorder %s18, 4
      %s28 = sphi 0, %s30
      %s31 = sphi 0, %s28
      %s32 = sphi 0, %s31
      %s48 = sphi 0, %s32
      %s52 = sphi 0, %s52
      %s54 = sphi 0, %s52
      %s55 = sphi 0, %s54
      %s69 = sphi 0, %s55
      %s73 = sphi 0, %s73
      %s75 = sphi 0, %s73
      %s76 = sphi 0, %s75
      %s90 = sphi 0, %s76
      %s94 = sphi 0, %s94
      %s96 = sphi 0, %s94
      %s97 = sphi 0, %s96
      %s111 = sphi 0, %s97
      %s115 = sphi 0, %s115
      %s117 = sphi 0, %s115
      %s118 = sphi 0, %s117
      %s132 = sphi 0, %s118
      %s138 = sphi 0, %s140
      %s141 = sphi 0, %s138
      %s142 = sphi 0, %s141
      %s158 = sphi 0, %s142
    $region4: #{tpu_custom_call.1} parent=1 // loop_header_branch
      %21 = sbr.rel (%p19) target = $region8
    $region5: #{tpu_custom_call.1} parent=1 // loop_body
      %s23 = ssub.s32 %s18, 1
      %s24 = ssub.s32 %s18, 2
      %s25 = sadd.s32 %s18, 1
      %s26 = ssub.s32 %s18, %s25
      %p27 = scmp.eq.s32.totalorder %s26, 0
      %s29 = sadd.s32 %s28, 1
      %s30 = scalar_select %p27, %s28, %s29
      %p33 = pneg %p27
      %p34 = scmp.eq.s32.totalorder %s18, 1
      %p35 = por %p33, %p34
      %p36 = scmp.ne.s32.totalorder %s28, %s31
      %p37 = scmp.eq.s32.totalorder %s18, 0
      %p38 = por %p36, %p37
      %p39 = scmp.ne.s32.totalorder %s28, %s31
      %p40 = scmp.eq.s32.totalorder %s23, 1
      %p41 = por %p39, %p40
      %p42 = scmp.ne.s32.totalorder %s31, %s32
      %p43 = scmp.eq.s32.totalorder %s23, 0
      %p44 = por %p42, %p43
      %p45 = scmp.ne.s32.totalorder %s31, %s32
      %p46 = scmp.eq.s32.totalorder %s24, 1
      %p47 = por %p45, %p46
      %p49 = scmp.ne.s32.totalorder %s32, %s48
      %p50 = scmp.eq.s32.totalorder %s24, 0
      %p51 = por %p49, %p50
      %s53 = sadd.s32 %s52, 1
      %p56 = scmp.eq.s32.totalorder %s18, 1
      %p57 = scmp.ne.s32.totalorder %s52, %s54
      %p58 = scmp.eq.s32.totalorder %s18, 0
      %p59 = por %p57, %p58
      %p60 = scmp.ne.s32.totalorder %s52, %s54
      %p61 = scmp.eq.s32.totalorder %s23, 1
      %p62 = por %p60, %p61
      %p63 = scmp.ne.s32.totalorder %s54, %s55
      %p64 = scmp.eq.s32.totalorder %s23, 0
      %p65 = por %p63, %p64
      %p66 = scmp.ne.s32.totalorder %s54, %s55
      %p67 = scmp.eq.s32.totalorder %s24, 1
      %p68 = por %p66, %p67
      %p70 = scmp.ne.s32.totalorder %s55, %s69
      %p71 = scmp.eq.s32.totalorder %s24, 0
      %p72 = por %p70, %p71
      %s74 = sadd.s32 %s73, 1
      %p77 = scmp.eq.s32.totalorder %s18, 1
      %p78 = scmp.ne.s32.totalorder %s73, %s75
      %p79 = scmp.eq.s32.totalorder %s18, 0
      %p80 = por %p78, %p79
      %p81 = scmp.ne.s32.totalorder %s73, %s75
      %p82 = scmp.eq.s32.totalorder %s23, 1
      %p83 = por %p81, %p82
      %p84 = scmp.ne.s32.totalorder %s75, %s76
      %p85 = scmp.eq.s32.totalorder %s23, 0
      %p86 = por %p84, %p85
      %p87 = scmp.ne.s32.totalorder %s75, %s76
      %p88 = scmp.eq.s32.totalorder %s24, 1
      %p89 = por %p87, %p88
      %p91 = scmp.ne.s32.totalorder %s76, %s90
      %p92 = scmp.eq.s32.totalorder %s24, 0
      %p93 = por %p91, %p92
      %s95 = sadd.s32 %s94, 1
      %p98 = scmp.eq.s32.totalorder %s18, 1
      %p99 = scmp.ne.s32.totalorder %s94, %s96
      %p100 = scmp.eq.s32.totalorder %s18, 0
      %p101 = por %p99, %p100
      %p102 = scmp.ne.s32.totalorder %s94, %s96
      %p103 = scmp.eq.s32.totalorder %s23, 1
      %p104 = por %p102, %p103
      %p105 = scmp.ne.s32.totalorder %s96, %s97
      %p106 = scmp.eq.s32.totalorder %s23, 0
      %p107 = por %p105, %p106
      %p108 = scmp.ne.s32.totalorder %s96, %s97
      %p109 = scmp.eq.s32.totalorder %s24, 1
      %p110 = por %p108, %p109
      %p112 = scmp.ne.s32.totalorder %s97, %s111
      %p113 = scmp.eq.s32.totalorder %s24, 0
      %p114 = por %p112, %p113
      %s116 = sadd.s32 %s115, 1
      %p119 = scmp.eq.s32.totalorder %s18, 1
      %p120 = scmp.ne.s32.totalorder %s115, %s117
      %p121 = scmp.eq.s32.totalorder %s18, 0
      %p122 = por %p120, %p121
      %p123 = scmp.ne.s32.totalorder %s115, %s117
      %p124 = scmp.eq.s32.totalorder %s23, 1
      %p125 = por %p123, %p124
      %p126 = scmp.ne.s32.totalorder %s117, %s118
      %p127 = scmp.eq.s32.totalorder %s23, 0
      %p128 = por %p126, %p127
      %p129 = scmp.ne.s32.totalorder %s117, %s118
      %p130 = scmp.eq.s32.totalorder %s24, 1
      %p131 = por %p129, %p130
      %p133 = scmp.ne.s32.totalorder %s118, %s132
      %p134 = scmp.eq.s32.totalorder %s24, 0
      %p135 = por %p133, %p134
      %s136 = ssub.s32 %s18, %s25
      %p137 = scmp.eq.s32.totalorder %s136, 0
      %s139 = sadd.s32 %s138, 1
      %s140 = scalar_select %p137, %s138, %s139
      %p143 = pneg %p137
      %p144 = scmp.eq.s32.totalorder %s18, 1
      %p145 = por %p143, %p144
      %p146 = scmp.ne.s32.totalorder %s138, %s141
      %p147 = scmp.eq.s32.totalorder %s18, 0
      %p148 = por %p146, %p147
      %p149 = scmp.ne.s32.totalorder %s138, %s141
      %p150 = scmp.eq.s32.totalorder %s23, 1
      %p151 = por %p149, %p150
      %p152 = scmp.ne.s32.totalorder %s141, %s142
      %p153 = scmp.eq.s32.totalorder %s23, 0
      %p154 = por %p152, %p153
      %p155 = scmp.ne.s32.totalorder %s141, %s142
      %p156 = scmp.eq.s32.totalorder %s24, 1
      %p157 = por %p155, %p156
      %p159 = scmp.ne.s32.totalorder %s142, %s158
      %p160 = scmp.eq.s32.totalorder %s24, 0
      %p161 = por %p159, %p160
      %p162 = scmp.le.s32.totalorder 1, %s18
      %p163 = scmp.lt.s32.totalorder %s18, 3
      %p164 = pnand %p162, %p163
      %p165 = pneg %p164
      // Predicated region
      $region9: #{tpu_custom_call.1} parent=5 // pred_check
        _
      $region10: #{tpu_custom_call.1} parent=5 // pred_check_branch
        %167 = sbr.rel (%p164) target = $region12
      $region11: #{tpu_custom_call.1} parent=5 // pred_region
        %s168 = ssub.s32 %s18, 1
        // Predicated region
        $region13: #{tpu_custom_call.1} parent=11 // pred_check
          %p169 = pneg %p65
        $region14: #{tpu_custom_call.1} parent=11 // pred_check_branch
          %171 = sbr.rel (%p169) target = $region16
        $region15: #{tpu_custom_call.1} parent=11 // pred_region
          %s173 = ssub.s32 7168, 7168
          %174 = vsyncadd [#allocation6], %s173
          %s175 = sshll.u32 [#allocation5], 4
          %s176 = int_to_ptr.vmem [resolvable:$true] %s175
          %181 = dma.hbm_to_vmem [thread:$0]  %s1, 7168, %s176, [#allocation6], 64, 64, 4
        $region16: #{tpu_custom_call.1} parent=11 // pred_fallthru
          _
        // Predicated region
        $region17: #{tpu_custom_call.1} parent=11 // pred_check
          %p182 = pneg %p86
        $region18: #{tpu_custom_call.1} parent=11 // pred_check_branch
          %184 = sbr.rel (%p182) target = $region20
        $region19: #{tpu_custom_call.1} parent=11 // pred_region
          _
        $region20: #{tpu_custom_call.1} parent=11 // pred_fallthru
          _
        // Predicated region
        $region21: #{tpu_custom_call.1} parent=11 // pred_check
          %p185 = pneg %p107
        $region22: #{tpu_custom_call.1} parent=11 // pred_check_branch
          %187 = sbr.rel (%p185) target = $region24
        $region23: #{tpu_custom_call.1} parent=11 // pred_region
          %s189 = ssub.s32 1024, 1024
          %190 = vsyncadd [#allocation6], %s189
          %s191 = sshll.u32 [#allocation7], 4
          %s192 = int_to_ptr.vmem [resolvable:$true] %s191
          %197 = dma.hbm_to_vmem [thread:$0]  %s3, 1024, %s192, [#allocation6], 64, 64, 4
        $region24: #{tpu_custom_call.1} parent=11 // pred_fallthru
          _
        // Predicated region
        $region25: #{tpu_custom_call.1} parent=11 // pred_check
          %p198 = pneg %p128
        $region26: #{tpu_custom_call.1} parent=11 // pred_check_branch
          %200 = sbr.rel (%p198) target = $region28
        $region27: #{tpu_custom_call.1} parent=11 // pred_region
          _
        $region28: #{tpu_custom_call.1} parent=11 // pred_fallthru
          _
      $region12: #{tpu_custom_call.1} parent=5 // pred_fallthru
        _
      %p201 = scmp.lt.s32.totalorder %s18, 2
      // Predicated region
      $region29: #{tpu_custom_call.1} parent=5 // pred_check
        %p202 = pneg %p201
      $region30: #{tpu_custom_call.1} parent=5 // pred_check_branch
        %204 = sbr.rel (%p202) target = $region32
      $region31: #{tpu_custom_call.1} parent=5 // pred_region
        // Predicated region
        $region33: #{tpu_custom_call.1} parent=31 // pred_check
          %p205 = pneg %p38
        $region34: #{tpu_custom_call.1} parent=31 // pred_check_branch
          %207 = sbr.rel (%p205) target = $region36
        $region35: #{tpu_custom_call.1} parent=31 // pred_region
          %s208 = sand.u32 %s28, 1
          %s209 = scalar_lea.sflag [#allocation3], %s208
          %s210 = sand.u32 %s28, 1
          %s211 = smul.addr %s210, 448
          %s212 = scalar_lea.vmem [#allocation2], %s211
          %s213 = smul.u32 16, %s18
          %s215 = ssub.s32 7168, 7168
          %216 = vsyncadd %s209, %s215
          %s217 = smul.addr %s213, 7
          %s218 = smul.addr %s217, 64
          %s219 = scalar_lea.hbm %s0, %s218
          %s220 = sshll.u32 %s212, 4
          %s221 = int_to_ptr.vmem [resolvable:$true] %s220
          %226 = dma.hbm_to_vmem [thread:$0]  %s219, 7168, %s221, %s209, 448, 448, 28
        $region36: #{tpu_custom_call.1} parent=31 // pred_fallthru
          _
      $region32: #{tpu_custom_call.1} parent=5 // pred_fallthru
        _
      %p227 = scmp.le.s32.totalorder 1, %s18
      %p228 = scmp.lt.s32.totalorder %s18, 3
      %p229 = pnand %p227, %p228
      %p230 = pneg %p229
      // Predicated region
      $region37: #{tpu_custom_call.1} parent=5 // pred_check
        _
      $region38: #{tpu_custom_call.1} parent=5 // pred_check_branch
        %232 = sbr.rel (%p229) target = $region40
      $region39: #{tpu_custom_call.1} parent=5 // pred_region
        %s233 = ssub.s32 %s18, 1
        %s234 = sand.u32 %s31, 1
        %s235 = scalar_lea.sflag [#allocation3], %s234
        %s236 = sand.u32 %s31, 1
        %s237 = smul.addr %s236, 448
        %s238 = scalar_lea.vmem [#allocation2], %s237
        // Predicated region
        $region41: #{tpu_custom_call.1} parent=39 // pred_check
          %p239 = pneg %p44
        $region42: #{tpu_custom_call.1} parent=39 // pred_check_branch
          %241 = sbr.rel (%p239) target = $region44
        $region43: #{tpu_custom_call.1} parent=39 // pred_region
          %242 = dma.done %s235, 7168
        $region44: #{tpu_custom_call.1} parent=39 // pred_fallthru
          _
        // Predicated region
        $region45: #{tpu_custom_call.1} parent=39 // pred_check
          %p243 = pneg %p65
        $region46: #{tpu_custom_call.1} parent=39 // pred_check_branch
          %245 = sbr.rel (%p243) target = $region48
        $region47: #{tpu_custom_call.1} parent=39 // pred_region
          %246 = dma.done [#allocation6], 7168
        $region48: #{tpu_custom_call.1} parent=39 // pred_fallthru
          _
        // Predicated region
        $region49: #{tpu_custom_call.1} parent=39 // pred_check
          %p247 = pneg %p107
        $region50: #{tpu_custom_call.1} parent=39 // pred_check_branch
          %249 = sbr.rel (%p247) target = $region52
        $region51: #{tpu_custom_call.1} parent=39 // pred_region
          %250 = dma.done [#allocation6], 1024
        $region52: #{tpu_custom_call.1} parent=39 // pred_fallthru
          _
        %s251 = sand.u32 %s31, 1
        %s252 = scalar_lea.sflag [#allocation3], %s251
        %s253 = sand.u32 %s31, 1
        %s254 = smul.addr %s253, 448
        %s255 = scalar_lea.vmem [#allocation2], %s254
        %p256 = pneg %p44
        %p257 = pneg %p41
        %p258 = pneg %p65
        %p259 = pneg %p62
        %p260 = pneg %p86
        %p261 = pneg %p83
        %p262 = pneg %p107
        %p263 = pneg %p104
        %p264 = pneg %p128
        %p265 = pneg %p125
        %p266 = pneg %p154
        %p267 = pneg %p151
        %s268 = sand.u32 %s141, 1
        %s269 = scalar_lea.sflag [#allocation4], %s268
        %s270 = sand.u32 %s141, 1
        %s271 = smul.addr %s270, 128
        %s272 = scalar_lea.vmem [#allocation8], %s271
        %s273 = smul.u32 16, %s23
        %s274 = smul.u32 16, %s23
        %v276 = vld [vmem:[%s238] sm:$0xff]
        %v277 = vld [vmem:[%s238 + $0x8] sm:$0xff]
        %v278 = vld [vmem:[%s238 + $0x10] sm:$0xff]
        %v279 = vld [vmem:[%s238 + $0x18] sm:$0xf]
        %v280 = vld [vmem:[%s238 + $0x1c] sm:$0xff]
        %v281 = vld [vmem:[%s238 + $0x24] sm:$0xff]
        %v282 = vld [vmem:[%s238 + $0x2c] sm:$0xff]
        %v283 = vld [vmem:[%s238 + $0x34] sm:$0xf]
        %v284 = vld [vmem:[%s238 + $0x38] sm:$0xff]
        %v285 = vld [vmem:[%s238 + $0x40] sm:$0xff]
        %v286 = vld [vmem:[%s238 + $0x48] sm:$0xff]
        %v287 = vld [vmem:[%s238 + $0x50] sm:$0xf]
        %v288 = vld [vmem:[%s238 + $0x54] sm:$0xff]
        %v289 = vld [vmem:[%s238 + $0x5c] sm:$0xff]
        %v290 = vld [vmem:[%s238 + $0x64] sm:$0xff]
        %v291 = vld [vmem:[%s238 + $0x6c] sm:$0xf]
        %v292 = vld [vmem:[%s238 + $0x70] sm:$0xff]
        %v293 = vld [vmem:[%s238 + $0x78] sm:$0xff]
        %v294 = vld [vmem:[%s238 + $0x80] sm:$0xff]
        %v295 = vld [vmem:[%s238 + $0x88] sm:$0xf]
        %v296 = vld [vmem:[%s238 + $0x8c] sm:$0xff]
        %v297 = vld [vmem:[%s238 + $0x94] sm:$0xff]
        %v298 = vld [vmem:[%s238 + $0x9c] sm:$0xff]
        %v299 = vld [vmem:[%s238 + $0xa4] sm:$0xf]
        %v300 = vld [vmem:[%s238 + $0xa8] sm:$0xff]
        %v301 = vld [vmem:[%s238 + $0xb0] sm:$0xff]
        %v302 = vld [vmem:[%s238 + $0xb8] sm:$0xff]
        %v303 = vld [vmem:[%s238 + $0xc0] sm:$0xf]
        %v304 = vld [vmem:[%s238 + $0xc4] sm:$0xff]
        %v305 = vld [vmem:[%s238 + $0xcc] sm:$0xff]
        %v306 = vld [vmem:[%s238 + $0xd4] sm:$0xff]
        %v307 = vld [vmem:[%s238 + $0xdc] sm:$0xf]
        %v308 = vld [vmem:[%s238 + $0xe0] sm:$0xff]
        %v309 = vld [vmem:[%s238 + $0xe8] sm:$0xff]
        %v310 = vld [vmem:[%s238 + $0xf0] sm:$0xff]
        %v311 = vld [vmem:[%s238 + $0xf8] sm:$0xf]
        %v312 = vld [vmem:[%s238 + $0xfc] sm:$0xff]
        %v313 = vld [vmem:[%s238 + $0x104] sm:$0xff]
        %v314 = vld [vmem:[%s238 + $0x10c] sm:$0xff]
        %v315 = vld [vmem:[%s238 + $0x114] sm:$0xf]
        %v316 = vld [vmem:[%s238 + $0x118] sm:$0xff]
        %v317 = vld [vmem:[%s238 + $0x120] sm:$0xff]
        %v318 = vld [vmem:[%s238 + $0x128] sm:$0xff]
        %v319 = vld [vmem:[%s238 + $0x130] sm:$0xf]
        %v320 = vld [vmem:[%s238 + $0x134] sm:$0xff]
        %v321 = vld [vmem:[%s238 + $0x13c] sm:$0xff]
        %v322 = vld [vmem:[%s238 + $0x144] sm:$0xff]
        %v323 = vld [vmem:[%s238 + $0x14c] sm:$0xf]
        %v324 = vld [vmem:[%s238 + $0x150] sm:$0xff]
        %v325 = vld [vmem:[%s238 + $0x158] sm:$0xff]
        %v326 = vld [vmem:[%s238 + $0x160] sm:$0xff]
        %v327 = vld [vmem:[%s238 + $0x168] sm:$0xf]
        %v328 = vld [vmem:[%s238 + $0x16c] sm:$0xff]
        %v329 = vld [vmem:[%s238 + $0x174] sm:$0xff]
        %v330 = vld [vmem:[%s238 + $0x17c] sm:$0xff]
        %v331 = vld [vmem:[%s238 + $0x184] sm:$0xf]
        %v332 = vld [vmem:[%s238 + $0x188] sm:$0xff]
        %v333 = vld [vmem:[%s238 + $0x190] sm:$0xff]
        %v334 = vld [vmem:[%s238 + $0x198] sm:$0xff]
        %v335 = vld [vmem:[%s238 + $0x1a0] sm:$0xf]
        %v336 = vld [vmem:[%s238 + $0x1a4] sm:$0xff]
        %v337 = vld [vmem:[%s238 + $0x1ac] sm:$0xff]
        %v338 = vld [vmem:[%s238 + $0x1b4] sm:$0xff]
        %v339 = vld [vmem:[%s238 + $0x1bc] sm:$0xf]
        %v340 = vld [vmem:[#allocation5] sm:$0xf]
        %v341 = vld [vmem:[#allocation5 + $0x4] sm:$0xf]
        %v342 = vld [vmem:[#allocation5 + $0x8] sm:$0xf]
        %v343 = vld [vmem:[#allocation5 + $0xc] sm:$0xf]
        %v344 = vld [vmem:[#allocation5 + $0x10] sm:$0xf]
        %v345 = vld [vmem:[#allocation5 + $0x14] sm:$0xf]
        %v346 = vld [vmem:[#allocation5 + $0x18] sm:$0xf]
        %v347 = vld [vmem:[#allocation5 + $0x1c] sm:$0xf]
        %v348 = vld [vmem:[#allocation5 + $0x20] sm:$0xf]
        %v349 = vld [vmem:[#allocation5 + $0x24] sm:$0xf]
        %v350 = vld [vmem:[#allocation5 + $0x28] sm:$0xf]
        %v351 = vld [vmem:[#allocation5 + $0x2c] sm:$0xf]
        %v352 = vld [vmem:[#allocation5 + $0x30] sm:$0xf]
        %v353 = vld [vmem:[#allocation5 + $0x34] sm:$0xf]
        %v354 = vld [vmem:[#allocation5 + $0x38] sm:$0xf]
        %v355 = vld [vmem:[#allocation5 + $0x3c] sm:$0xf]
        %v356 = vld [vmem:[#allocation5 + $0x40] sm:$0xf]
        %v357 = vld [vmem:[#allocation5 + $0x44] sm:$0xf]
        %v358 = vld [vmem:[#allocation5 + $0x48] sm:$0xf]
        %v359 = vld [vmem:[#allocation5 + $0x4c] sm:$0xf]
        %v360 = vld [vmem:[#allocation5 + $0x50] sm:$0xf]
        %v361 = vld [vmem:[#allocation5 + $0x54] sm:$0xf]
        %v362 = vld [vmem:[#allocation5 + $0x58] sm:$0xf]
        %v363 = vld [vmem:[#allocation5 + $0x5c] sm:$0xf]
        %v364 = vld [vmem:[#allocation5 + $0x60] sm:$0xf]
        %v365 = vld [vmem:[#allocation5 + $0x64] sm:$0xf]
        %v366 = vld [vmem:[#allocation5 + $0x68] sm:$0xf]
        %v367 = vld [vmem:[#allocation5 + $0x6c] sm:$0xf]
        %v368 = vld [vmem:[#allocation5 + $0x70] sm:$0xf]
        %v369 = vld [vmem:[#allocation5 + $0x74] sm:$0xf]
        %v370 = vld [vmem:[#allocation5 + $0x78] sm:$0xf]
        %v371 = vld [vmem:[#allocation5 + $0x7c] sm:$0xf]
        %v372 = vld [vmem:[#allocation5 + $0x80] sm:$0xf]
        %v373 = vld [vmem:[#allocation5 + $0x84] sm:$0xf]
        %v374 = vld [vmem:[#allocation5 + $0x88] sm:$0xf]
        %v375 = vld [vmem:[#allocation5 + $0x8c] sm:$0xf]
        %v376 = vld [vmem:[#allocation5 + $0x90] sm:$0xf]
        %v377 = vld [vmem:[#allocation5 + $0x94] sm:$0xf]
        %v378 = vld [vmem:[#allocation5 + $0x98] sm:$0xf]
        %v379 = vld [vmem:[#allocation5 + $0x9c] sm:$0xf]
        %v380 = vld [vmem:[#allocation5 + $0xa0] sm:$0xf]
        %v381 = vld [vmem:[#allocation5 + $0xa4] sm:$0xf]
        %v382 = vld [vmem:[#allocation5 + $0xa8] sm:$0xf]
        %v383 = vld [vmem:[#allocation5 + $0xac] sm:$0xf]
        %v384 = vld [vmem:[#allocation5 + $0xb0] sm:$0xf]
        %v385 = vld [vmem:[#allocation5 + $0xb4] sm:$0xf]
        %v386 = vld [vmem:[#allocation5 + $0xb8] sm:$0xf]
        %v387 = vld [vmem:[#allocation5 + $0xbc] sm:$0xf]
        %v388 = vld [vmem:[#allocation5 + $0xc0] sm:$0xf]
        %v389 = vld [vmem:[#allocation5 + $0xc4] sm:$0xf]
        %v390 = vld [vmem:[#allocation5 + $0xc8] sm:$0xf]
        %v391 = vld [vmem:[#allocation5 + $0xcc] sm:$0xf]
        %v392 = vld [vmem:[#allocation5 + $0xd0] sm:$0xf]
        %v393 = vld [vmem:[#allocation5 + $0xd4] sm:$0xf]
        %v394 = vld [vmem:[#allocation5 + $0xd8] sm:$0xf]
        %v395 = vld [vmem:[#allocation5 + $0xdc] sm:$0xf]
        %v396 = vld [vmem:[#allocation5 + $0xe0] sm:$0xf]
        %v397 = vld [vmem:[#allocation5 + $0xe4] sm:$0xf]
        %v398 = vld [vmem:[#allocation5 + $0xe8] sm:$0xf]
        %v399 = vld [vmem:[#allocation5 + $0xec] sm:$0xf]
        %v400 = vld [vmem:[#allocation5 + $0xf0] sm:$0xf]
        %v401 = vld [vmem:[#allocation5 + $0xf4] sm:$0xf]
        %v402 = vld [vmem:[#allocation5 + $0xf8] sm:$0xf]
        %v403 = vld [vmem:[#allocation5 + $0xfc] sm:$0xf]
        %v404 = vld [vmem:[#allocation5 + $0x100] sm:$0xf]
        %v405 = vld [vmem:[#allocation5 + $0x104] sm:$0xf]
        %v406 = vld [vmem:[#allocation5 + $0x108] sm:$0xf]
        %v407 = vld [vmem:[#allocation5 + $0x10c] sm:$0xf]
        %v408 = vld [vmem:[#allocation5 + $0x110] sm:$0xf]
        %v409 = vld [vmem:[#allocation5 + $0x114] sm:$0xf]
        %v410 = vld [vmem:[#allocation5 + $0x118] sm:$0xf]
        %v411 = vld [vmem:[#allocation5 + $0x11c] sm:$0xf]
        %v412 = vld [vmem:[#allocation5 + $0x120] sm:$0xf]
        %v413 = vld [vmem:[#allocation5 + $0x124] sm:$0xf]
        %v414 = vld [vmem:[#allocation5 + $0x128] sm:$0xf]
        %v415 = vld [vmem:[#allocation5 + $0x12c] sm:$0xf]
        %v416 = vld [vmem:[#allocation5 + $0x130] sm:$0xf]
        %v417 = vld [vmem:[#allocation5 + $0x134] sm:$0xf]
        %v418 = vld [vmem:[#allocation5 + $0x138] sm:$0xf]
        %v419 = vld [vmem:[#allocation5 + $0x13c] sm:$0xf]
        %v420 = vld [vmem:[#allocation5 + $0x140] sm:$0xf]
        %v421 = vld [vmem:[#allocation5 + $0x144] sm:$0xf]
        %v422 = vld [vmem:[#allocation5 + $0x148] sm:$0xf]
        %v423 = vld [vmem:[#allocation5 + $0x14c] sm:$0xf]
        %v424 = vld [vmem:[#allocation5 + $0x150] sm:$0xf]
        %v425 = vld [vmem:[#allocation5 + $0x154] sm:$0xf]
        %v426 = vld [vmem:[#allocation5 + $0x158] sm:$0xf]
        %v427 = vld [vmem:[#allocation5 + $0x15c] sm:$0xf]
        %v428 = vld [vmem:[#allocation5 + $0x160] sm:$0xf]
        %v429 = vld [vmem:[#allocation5 + $0x164] sm:$0xf]
        %v430 = vld [vmem:[#allocation5 + $0x168] sm:$0xf]
        %v431 = vld [vmem:[#allocation5 + $0x16c] sm:$0xf]
        %v432 = vld [vmem:[#allocation5 + $0x170] sm:$0xf]
        %v433 = vld [vmem:[#allocation5 + $0x174] sm:$0xf]
        %v434 = vld [vmem:[#allocation5 + $0x178] sm:$0xf]
        %v435 = vld [vmem:[#allocation5 + $0x17c] sm:$0xf]
        %v436 = vld [vmem:[#allocation5 + $0x180] sm:$0xf]
        %v437 = vld [vmem:[#allocation5 + $0x184] sm:$0xf]
        %v438 = vld [vmem:[#allocation5 + $0x188] sm:$0xf]
        %v439 = vld [vmem:[#allocation5 + $0x18c] sm:$0xf]
        %v440 = vld [vmem:[#allocation5 + $0x190] sm:$0xf]
        %v441 = vld [vmem:[#allocation5 + $0x194] sm:$0xf]
        %v442 = vld [vmem:[#allocation5 + $0x198] sm:$0xf]
        %v443 = vld [vmem:[#allocation5 + $0x19c] sm:$0xf]
        %v444 = vld [vmem:[#allocation5 + $0x1a0] sm:$0xf]
        %v445 = vld [vmem:[#allocation5 + $0x1a4] sm:$0xf]
        %v446 = vld [vmem:[#allocation5 + $0x1a8] sm:$0xf]
        %v447 = vld [vmem:[#allocation5 + $0x1ac] sm:$0xf]
        %v448 = vld [vmem:[#allocation5 + $0x1b0] sm:$0xf]
        %v449 = vld [vmem:[#allocation5 + $0x1b4] sm:$0xf]
        %v450 = vld [vmem:[#allocation5 + $0x1b8] sm:$0xf]
        %v451 = vld [vmem:[#allocation5 + $0x1bc] sm:$0xf]
        %v452 = vld [vmem:[%s2] sm:$0x1]
        %v454 = vlaneseq
        %v455 = vshrl.u32 %v454, 7
        %v456 = vsub.s32 0, %v455
        %v457 = vrot.slane %v452, %v456
        %v523 = vunpack.c.l.b16 %v276
        %v524 = vunpack.c.h.b16 %v276
        %v525 = vunpack.c.l.b16 %v277
        %v526 = vunpack.c.h.b16 %v277
        %v527 = vunpack.c.l.b16 %v278
        %v528 = vunpack.c.h.b16 %v278
        %v529 = vunpack.c.l.b16 %v279
        %v530 = vunpack.c.l.b16 %v280
        %v531 = vunpack.c.h.b16 %v280
        %v532 = vunpack.c.l.b16 %v281
        %v533 = vunpack.c.h.b16 %v281
        %v534 = vunpack.c.l.b16 %v282
        %v535 = vunpack.c.h.b16 %v282
        %v536 = vunpack.c.l.b16 %v283
        %v537 = vunpack.c.l.b16 %v284
        %v538 = vunpack.c.h.b16 %v284
        %v539 = vunpack.c.l.b16 %v285
        %v540 = vunpack.c.h.b16 %v285
        %v541 = vunpack.c.l.b16 %v286
        %v542 = vunpack.c.h.b16 %v286
        %v543 = vunpack.c.l.b16 %v287
        %v544 = vunpack.c.l.b16 %v288
        %v545 = vunpack.c.h.b16 %v288
        %v546 = vunpack.c.l.b16 %v289
        %v547 = vunpack.c.h.b16 %v289
        %v548 = vunpack.c.l.b16 %v290
        %v549 = vunpack.c.h.b16 %v290
        %v550 = vunpack.c.l.b16 %v291
        %v551 = vunpack.c.l.b16 %v292
        %v552 = vunpack.c.h.b16 %v292
        %v553 = vunpack.c.l.b16 %v293
        %v554 = vunpack.c.h.b16 %v293
        %v555 = vunpack.c.l.b16 %v294
        %v556 = vunpack.c.h.b16 %v294
        %v557 = vunpack.c.l.b16 %v295
        %v558 = vunpack.c.l.b16 %v296
        %v559 = vunpack.c.h.b16 %v296
        %v560 = vunpack.c.l.b16 %v297
        %v561 = vunpack.c.h.b16 %v297
        %v562 = vunpack.c.l.b16 %v298
        %v563 = vunpack.c.h.b16 %v298
        %v564 = vunpack.c.l.b16 %v299
        %v565 = vunpack.c.l.b16 %v300
        %v566 = vunpack.c.h.b16 %v300
        %v567 = vunpack.c.l.b16 %v301
        %v568 = vunpack.c.h.b16 %v301
        %v569 = vunpack.c.l.b16 %v302
        %v570 = vunpack.c.h.b16 %v302
        %v571 = vunpack.c.l.b16 %v303
        %v572 = vunpack.c.l.b16 %v304
        %v573 = vunpack.c.h.b16 %v304
        %v574 = vunpack.c.l.b16 %v305
        %v575 = vunpack.c.h.b16 %v305
        %v576 = vunpack.c.l.b16 %v306
        %v577 = vunpack.c.h.b16 %v306
        %v578 = vunpack.c.l.b16 %v307
        %v579 = vunpack.c.l.b16 %v308
        %v580 = vunpack.c.h.b16 %v308
        %v581 = vunpack.c.l.b16 %v309
        %v582 = vunpack.c.h.b16 %v309
        %v583 = vunpack.c.l.b16 %v310
        %v584 = vunpack.c.h.b16 %v310
        %v585 = vunpack.c.l.b16 %v311
        %v586 = vunpack.c.l.b16 %v312
        %v587 = vunpack.c.h.b16 %v312
        %v588 = vunpack.c.l.b16 %v313
        %v589 = vunpack.c.h.b16 %v313
        %v590 = vunpack.c.l.b16 %v314
        %v591 = vunpack.c.h.b16 %v314
        %v592 = vunpack.c.l.b16 %v315
        %v593 = vunpack.c.l.b16 %v316
        %v594 = vunpack.c.h.b16 %v316
        %v595 = vunpack.c.l.b16 %v317
        %v596 = vunpack.c.h.b16 %v317
        %v597 = vunpack.c.l.b16 %v318
        %v598 = vunpack.c.h.b16 %v318
        %v599 = vunpack.c.l.b16 %v319
        %v600 = vunpack.c.l.b16 %v320
        %v601 = vunpack.c.h.b16 %v320
        %v602 = vunpack.c.l.b16 %v321
        %v603 = vunpack.c.h.b16 %v321
        %v604 = vunpack.c.l.b16 %v322
        %v605 = vunpack.c.h.b16 %v322
        %v606 = vunpack.c.l.b16 %v323
        %v607 = vunpack.c.l.b16 %v324
        %v608 = vunpack.c.h.b16 %v324
        %v609 = vunpack.c.l.b16 %v325
        %v610 = vunpack.c.h.b16 %v325
        %v611 = vunpack.c.l.b16 %v326
        %v612 = vunpack.c.h.b16 %v326
        %v613 = vunpack.c.l.b16 %v327
        %v614 = vunpack.c.l.b16 %v328
        %v615 = vunpack.c.h.b16 %v328
        %v616 = vunpack.c.l.b16 %v329
        %v617 = vunpack.c.h.b16 %v329
        %v618 = vunpack.c.l.b16 %v330
        %v619 = vunpack.c.h.b16 %v330
        %v620 = vunpack.c.l.b16 %v331
        %v621 = vunpack.c.l.b16 %v332
        %v622 = vunpack.c.h.b16 %v332
        %v623 = vunpack.c.l.b16 %v333
        %v624 = vunpack.c.h.b16 %v333
        %v625 = vunpack.c.l.b16 %v334
        %v626 = vunpack.c.h.b16 %v334
        %v627 = vunpack.c.l.b16 %v335
        %v628 = vunpack.c.l.b16 %v336
        %v629 = vunpack.c.h.b16 %v336
        %v630 = vunpack.c.l.b16 %v337
        %v631 = vunpack.c.h.b16 %v337
        %v632 = vunpack.c.l.b16 %v338
        %v633 = vunpack.c.h.b16 %v338
        %v634 = vunpack.c.l.b16 %v339
        %v635 = vpack.c.b16 %v530, %v523
        %v636 = vpack.c.b16 %v531, %v524
        %v637 = vpack.c.b16 %v532, %v525
        %v638 = vpack.c.b16 %v533, %v526
        %v639 = vpack.c.b16 %v534, %v527
        %v640 = vpack.c.b16 %v535, %v528
        %v641 = vpack.c.b16 %v536, %v529
        %v642 = vpack.c.b16 %v544, %v537
        %v643 = vpack.c.b16 %v545, %v538
        %v644 = vpack.c.b16 %v546, %v539
        %v645 = vpack.c.b16 %v547, %v540
        %v646 = vpack.c.b16 %v548, %v541
        %v647 = vpack.c.b16 %v549, %v542
        %v648 = vpack.c.b16 %v550, %v543
        %v649 = vpack.c.b16 %v558, %v551
        %v650 = vpack.c.b16 %v559, %v552
        %v651 = vpack.c.b16 %v560, %v553
        %v652 = vpack.c.b16 %v561, %v554
        %v653 = vpack.c.b16 %v562, %v555
        %v654 = vpack.c.b16 %v563, %v556
        %v655 = vpack.c.b16 %v564, %v557
        %v656 = vpack.c.b16 %v572, %v565
        %v657 = vpack.c.b16 %v573, %v566
        %v658 = vpack.c.b16 %v574, %v567
        %v659 = vpack.c.b16 %v575, %v568
        %v660 = vpack.c.b16 %v576, %v569
        %v661 = vpack.c.b16 %v577, %v570
        %v662 = vpack.c.b16 %v578, %v571
        %v663 = vpack.c.b16 %v586, %v579
        %v664 = vpack.c.b16 %v587, %v580
        %v665 = vpack.c.b16 %v588, %v581
        %v666 = vpack.c.b16 %v589, %v582
        %v667 = vpack.c.b16 %v590, %v583
        %v668 = vpack.c.b16 %v591, %v584
        %v669 = vpack.c.b16 %v592, %v585
        %v670 = vpack.c.b16 %v600, %v593
        %v671 = vpack.c.b16 %v601, %v594
        %v672 = vpack.c.b16 %v602, %v595
        %v673 = vpack.c.b16 %v603, %v596
        %v674 = vpack.c.b16 %v604, %v597
        %v675 = vpack.c.b16 %v605, %v598
        %v676 = vpack.c.b16 %v606, %v599
        %v677 = vpack.c.b16 %v614, %v607
        %v678 = vpack.c.b16 %v615, %v608
        %v679 = vpack.c.b16 %v616, %v609
        %v680 = vpack.c.b16 %v617, %v610
        %v681 = vpack.c.b16 %v618, %v611
        %v682 = vpack.c.b16 %v619, %v612
        %v683 = vpack.c.b16 %v620, %v613
        %v684 = vpack.c.b16 %v628, %v621
        %v685 = vpack.c.b16 %v629, %v622
        %v686 = vpack.c.b16 %v630, %v623
        %v687 = vpack.c.b16 %v631, %v624
        %v688 = vpack.c.b16 %v632, %v625
        %v689 = vpack.c.b16 %v633, %v626
        %v690 = vpack.c.b16 %v634, %v627
        %v859 = vunpack.c.l.b16 %v340
        %v860 = vunpack.c.l.b16 %v341
        %v861 = vunpack.c.l.b16 %v342
        %v862 = vunpack.c.l.b16 %v343
        %v863 = vunpack.c.l.b16 %v344
        %v864 = vunpack.c.l.b16 %v345
        %v865 = vunpack.c.l.b16 %v346
        %v866 = vunpack.c.l.b16 %v347
        %v867 = vunpack.c.l.b16 %v348
        %v868 = vunpack.c.l.b16 %v349
        %v869 = vunpack.c.l.b16 %v350
        %v870 = vunpack.c.l.b16 %v351
        %v871 = vunpack.c.l.b16 %v352
        %v872 = vunpack.c.l.b16 %v353
        %v873 = vunpack.c.l.b16 %v354
        %v874 = vunpack.c.l.b16 %v355
        %v875 = vunpack.c.l.b16 %v356
        %v876 = vunpack.c.l.b16 %v357
        %v877 = vunpack.c.l.b16 %v358
        %v878 = vunpack.c.l.b16 %v359
        %v879 = vunpack.c.l.b16 %v360
        %v880 = vunpack.c.l.b16 %v361
        %v881 = vunpack.c.l.b16 %v362
        %v882 = vunpack.c.l.b16 %v363
        %v883 = vunpack.c.l.b16 %v364
        %v884 = vunpack.c.l.b16 %v365
        %v885 = vunpack.c.l.b16 %v366
        %v886 = vunpack.c.l.b16 %v367
        %v887 = vunpack.c.l.b16 %v368
        %v888 = vunpack.c.l.b16 %v369
        %v889 = vunpack.c.l.b16 %v370
        %v890 = vunpack.c.l.b16 %v371
        %v891 = vunpack.c.l.b16 %v372
        %v892 = vunpack.c.l.b16 %v373
        %v893 = vunpack.c.l.b16 %v374
        %v894 = vunpack.c.l.b16 %v375
        %v895 = vunpack.c.l.b16 %v376
        %v896 = vunpack.c.l.b16 %v377
        %v897 = vunpack.c.l.b16 %v378
        %v898 = vunpack.c.l.b16 %v379
        %v899 = vunpack.c.l.b16 %v380
        %v900 = vunpack.c.l.b16 %v381
        %v901 = vunpack.c.l.b16 %v382
        %v902 = vunpack.c.l.b16 %v383
        %v903 = vunpack.c.l.b16 %v384
        %v904 = vunpack.c.l.b16 %v385
        %v905 = vunpack.c.l.b16 %v386
        %v906 = vunpack.c.l.b16 %v387
        %v907 = vunpack.c.l.b16 %v388
        %v908 = vunpack.c.l.b16 %v389
        %v909 = vunpack.c.l.b16 %v390
        %v910 = vunpack.c.l.b16 %v391
        %v911 = vunpack.c.l.b16 %v392
        %v912 = vunpack.c.l.b16 %v393
        %v913 = vunpack.c.l.b16 %v394
        %v914 = vunpack.c.l.b16 %v395
        %v915 = vunpack.c.l.b16 %v396
        %v916 = vunpack.c.l.b16 %v397
        %v917 = vunpack.c.l.b16 %v398
        %v918 = vunpack.c.l.b16 %v399
        %v919 = vunpack.c.l.b16 %v400
        %v920 = vunpack.c.l.b16 %v401
        %v921 = vunpack.c.l.b16 %v402
        %v922 = vunpack.c.l.b16 %v403
        %v923 = vunpack.c.l.b16 %v404
        %v924 = vunpack.c.l.b16 %v405
        %v925 = vunpack.c.l.b16 %v406
        %v926 = vunpack.c.l.b16 %v407
        %v927 = vunpack.c.l.b16 %v408
        %v928 = vunpack.c.l.b16 %v409
        %v929 = vunpack.c.l.b16 %v410
        %v930 = vunpack.c.l.b16 %v411
        %v931 = vunpack.c.l.b16 %v412
        %v932 = vunpack.c.l.b16 %v413
        %v933 = vunpack.c.l.b16 %v414
        %v934 = vunpack.c.l.b16 %v415
        %v935 = vunpack.c.l.b16 %v416
        %v936 = vunpack.c.l.b16 %v417
        %v937 = vunpack.c.l.b16 %v418
        %v938 = vunpack.c.l.b16 %v419
        %v939 = vunpack.c.l.b16 %v420
        %v940 = vunpack.c.l.b16 %v421
        %v941 = vunpack.c.l.b16 %v422
        %v942 = vunpack.c.l.b16 %v423
        %v943 = vunpack.c.l.b16 %v424
        %v944 = vunpack.c.l.b16 %v425
        %v945 = vunpack.c.l.b16 %v426
        %v946 = vunpack.c.l.b16 %v427
        %v947 = vunpack.c.l.b16 %v428
        %v948 = vunpack.c.l.b16 %v429
        %v949 = vunpack.c.l.b16 %v430
        %v950 = vunpack.c.l.b16 %v431
        %v951 = vunpack.c.l.b16 %v432
        %v952 = vunpack.c.l.b16 %v433
        %v953 = vunpack.c.l.b16 %v434
        %v954 = vunpack.c.l.b16 %v435
        %v955 = vunpack.c.l.b16 %v436
        %v956 = vunpack.c.l.b16 %v437
        %v957 = vunpack.c.l.b16 %v438
        %v958 = vunpack.c.l.b16 %v439
        %v959 = vunpack.c.l.b16 %v440
        %v960 = vunpack.c.l.b16 %v441
        %v961 = vunpack.c.l.b16 %v442
        %v962 = vunpack.c.l.b16 %v443
        %v963 = vunpack.c.l.b16 %v444
        %v964 = vunpack.c.l.b16 %v445
        %v965 = vunpack.c.l.b16 %v446
        %v966 = vunpack.c.l.b16 %v447
        %v967 = vunpack.c.l.b16 %v448
        %v968 = vunpack.c.l.b16 %v449
        %v969 = vunpack.c.l.b16 %v450
        %v970 = vunpack.c.l.b16 %v451
        %v971 = vpack.c.b16 %v860, %v859
        %v972 = vpack.c.b16 %v862, %v861
        %v973 = vpack.c.b16 %v864, %v863
        %v974 = vpack.c.b16 %v866, %v865
        %v975 = vpack.c.b16 %v868, %v867
        %v976 = vpack.c.b16 %v870, %v869
        %v977 = vpack.c.b16 %v872, %v871
        %v978 = vpack.c.b16 %v874, %v873
        %v979 = vpack.c.b16 %v876, %v875
        %v980 = vpack.c.b16 %v878, %v877
        %v981 = vpack.c.b16 %v880, %v879
        %v982 = vpack.c.b16 %v882, %v881
        %v983 = vpack.c.b16 %v884, %v883
        %v984 = vpack.c.b16 %v886, %v885
        %v985 = vpack.c.b16 %v888, %v887
        %v986 = vpack.c.b16 %v890, %v889
        %v987 = vpack.c.b16 %v892, %v891
        %v988 = vpack.c.b16 %v894, %v893
        %v989 = vpack.c.b16 %v896, %v895
        %v990 = vpack.c.b16 %v898, %v897
        %v991 = vpack.c.b16 %v900, %v899
        %v992 = vpack.c.b16 %v902, %v901
        %v993 = vpack.c.b16 %v904, %v903
        %v994 = vpack.c.b16 %v906, %v905
        %v995 = vpack.c.b16 %v908, %v907
        %v996 = vpack.c.b16 %v910, %v909
        %v997 = vpack.c.b16 %v912, %v911
        %v998 = vpack.c.b16 %v914, %v913
        %v999 = vpack.c.b16 %v916, %v915
        %v1000 = vpack.c.b16 %v918, %v917
        %v1001 = vpack.c.b16 %v920, %v919
        %v1002 = vpack.c.b16 %v922, %v921
        %v1003 = vpack.c.b16 %v924, %v923
        %v1004 = vpack.c.b16 %v926, %v925
        %v1005 = vpack.c.b16 %v928, %v927
        %v1006 = vpack.c.b16 %v930, %v929
        %v1007 = vpack.c.b16 %v932, %v931
        %v1008 = vpack.c.b16 %v934, %v933
        %v1009 = vpack.c.b16 %v936, %v935
        %v1010 = vpack.c.b16 %v938, %v937
        %v1011 = vpack.c.b16 %v940, %v939
        %v1012 = vpack.c.b16 %v942, %v941
        %v1013 = vpack.c.b16 %v944, %v943
        %v1014 = vpack.c.b16 %v946, %v945
        %v1015 = vpack.c.b16 %v948, %v947
        %v1016 = vpack.c.b16 %v950, %v949
        %v1017 = vpack.c.b16 %v952, %v951
        %v1018 = vpack.c.b16 %v954, %v953
        %v1019 = vpack.c.b16 %v956, %v955
        %v1020 = vpack.c.b16 %v958, %v957
        %v1021 = vpack.c.b16 %v960, %v959
        %v1022 = vpack.c.b16 %v962, %v961
        %v1023 = vpack.c.b16 %v964, %v963
        %v1024 = vpack.c.b16 %v966, %v965
        %v1025 = vpack.c.b16 %v968, %v967
        %v1026 = vpack.c.b16 %v970, %v969
        %1083 = vmatprep.subr.bf16.mxu0 0
        %1084 = vmatpush1.bf16.msra.mxu0 %v971
        %1085 = vmatprep.subr.bf16.mxu0 0
        %1086 = vmatpush1.bf16.msra.mxu0 %v972
        %1087 = vmatprep.subr.bf16.mxu0 0
        %1088 = vmatpush1.bf16.msra.mxu0 %v973
        %1089 = vmatprep.subr.bf16.mxu0 0
        %1090 = vmatpush1.bf16.msra.mxu0 %v974
        %1091 = vmatprep.subr.bf16.mxu0 0
        %1092 = vmatpush1.bf16.msra.mxu0 %v975
        %1093 = vmatprep.subr.bf16.mxu0 0
        %1094 = vmatpush1.bf16.msra.mxu0 %v976
        %1095 = vmatprep.subr.bf16.mxu0 0
        %1096 = vmatpush1.bf16.msra.mxu0 %v977
        %1097 = vmatprep.subr.bf16.mxu0 0
        %1098 = vmatpush1.bf16.msra.mxu0 %v978
        %1099 = vmatprep.subr.bf16.mxu0 0
        %1100 = vmatpush1.bf16.msra.mxu0 %v979
        %1101 = vmatprep.subr.bf16.mxu0 0
        %1102 = vmatpush1.bf16.msra.mxu0 %v980
        %1103 = vmatprep.subr.bf16.mxu0 0
        %1104 = vmatpush1.bf16.msra.mxu0 %v981
        %1105 = vmatprep.subr.bf16.mxu0 0
        %1106 = vmatpush1.bf16.msra.mxu0 %v982
        %1107 = vmatprep.subr.bf16.mxu0 0
        %1108 = vmatpush1.bf16.msra.mxu0 %v983
        %1109 = vmatprep.subr.bf16.mxu0 0
        %1110 = vmatpush1.bf16.msra.mxu0 %v984
        %1111 = vmatprep.subr.bf16.mxu0 0
        %1112 = vmatpush1.bf16.msra.mxu0 %v985
        %1113 = vmatprep.subr.bf16.mxu0 0
        %1114 = vmatpush1.bf16.msra.mxu0 %v986
        %1115 = vmatprep.mubr.bf16.mxu0 %v636
        %1116 = vmatmul.mubr.bf16.gmra.mrb[0].mxu0 %v635
        %v1117 = vpop.f32.mrb[0].mxu0
        %v1118 = vadd.f32 %v457, %v1117
        %v1119 = vpop.f32.mrb[0].mxu0
        %v1120 = vpop.f32.mrb[0].mxu0
        %v1121 = vadd.f32 %v457, %v1120
        %v1122 = vpop.f32.mrb[0].mxu0
        %1123 = vmatprep.mubr.bf16.mxu0 %v643
        %1124 = vmatmul.mubr.bf16.gmra.mrb[0].mxu0 %v642
        %v1125 = vpop.f32.mrb[0].mxu0
        %v1126 = vadd.f32 %v457, %v1125
        %v1127 = vpop.f32.mrb[0].mxu0
        %v1128 = vpop.f32.mrb[0].mxu0
        %v1129 = vadd.f32 %v457, %v1128
        %v1130 = vpop.f32.mrb[0].mxu0
        %1131 = vmatprep.mubr.bf16.mxu0 %v650
        %1132 = vmatmul.mubr.bf16.gmra.mrb[0].mxu0 %v649
        %v1133 = vpop.f32.mrb[0].mxu0
        %v1134 = vadd.f32 %v457, %v1133
        %v1135 = vpop.f32.mrb[0].mxu0
        %v1136 = vpop.f32.mrb[0].mxu0
        %v1137 = vadd.f32 %v457, %v1136
        %v1138 = vpop.f32.mrb[0].mxu0
        %1139 = vmatprep.mubr.bf16.mxu0 %v657
        %1140 = vmatmul.mubr.bf16.gmra.mrb[0].mxu0 %v656
        %v1141 = vpop.f32.mrb[0].mxu0
        %v1142 = vadd.f32 %v457, %v1141
        %v1143 = vpop.f32.mrb[0].mxu0
        %v1144 = vpop.f32.mrb[0].mxu0
        %v1145 = vadd.f32 %v457, %v1144
        %v1146 = vpop.f32.mrb[0].mxu0
        %1147 = vmatprep.mubr.bf16.mxu0 %v664
        %1148 = vmatmul.mubr.bf16.gmra.mrb[0].mxu0 %v663
        %v1149 = vpop.f32.mrb[0].mxu0
        %v1150 = vadd.f32 %v457, %v1149
        %v1151 = vpop.f32.mrb[0].mxu0
        %v1152 = vpop.f32.mrb[0].mxu0
        %v1153 = vadd.f32 %v457, %v1152
        %v1154 = vpop.f32.mrb[0].mxu0
        %1155 = vmatprep.mubr.bf16.mxu0 %v671
        %1156 = vmatmul.mubr.bf16.gmra.mrb[0].mxu0 %v670
        %v1157 = vpop.f32.mrb[0].mxu0
        %v1158 = vadd.f32 %v457, %v1157
        %v1159 = vpop.f32.mrb[0].mxu0
        %v1160 = vpop.f32.mrb[0].mxu0
        %v1161 = vadd.f32 %v457, %v1160
        %v1162 = vpop.f32.mrb[0].mxu0
        %1163 = vmatprep.mubr.bf16.mxu0 %v678
        %1164 = vmatmul.mubr.bf16.gmra.mrb[0].mxu0 %v677
        %v1165 = vpop.f32.mrb[0].mxu0
        %v1166 = vadd.f32 %v457, %v1165
        %v1167 = vpop.f32.mrb[0].mxu0
        %v1168 = vpop.f32.mrb[0].mxu0
        %v1169 = vadd.f32 %v457, %v1168
        %v1170 = vpop.f32.mrb[0].mxu0
        %1171 = vmatprep.mubr.bf16.mxu0 %v685
        %1172 = vmatmul.mubr.bf16.gmra.mrb[0].mxu0 %v684
        %v1173 = vpop.f32.mrb[0].mxu0
        %v1174 = vadd.f32 %v457, %v1173
        %v1175 = vpop.f32.mrb[0].mxu0
        %v1176 = vpop.f32.mrb[0].mxu0
        %v1177 = vadd.f32 %v457, %v1176
        %v1178 = vpop.f32.mrb[0].mxu0
        %1179 = vdwg.mxu0
        %1180 = vmatprep.subr.bf16.mxu0 0
        %1181 = vmatpush1.bf16.msra.mxu0 %v987
        %1182 = vmatprep.subr.bf16.mxu0 0
        %1183 = vmatpush1.bf16.msra.mxu0 %v988
        %1184 = vmatprep.subr.bf16.mxu0 0
        %1185 = vmatpush1.bf16.msra.mxu0 %v989
        %1186 = vmatprep.subr.bf16.mxu0 0
        %1187 = vmatpush1.bf16.msra.mxu0 %v990
        %1188 = vmatprep.subr.bf16.mxu0 0
        %1189 = vmatpush1.bf16.msra.mxu0 %v991
        %1190 = vmatprep.subr.bf16.mxu0 0
        %1191 = vmatpush1.bf16.msra.mxu0 %v992
        %1192 = vmatprep.subr.bf16.mxu0 0
        %1193 = vmatpush1.bf16.msra.mxu0 %v993
        %1194 = vmatprep.subr.bf16.mxu0 0
        %1195 = vmatpush1.bf16.msra.mxu0 %v994
        %1196 = vmatprep.subr.bf16.mxu0 0
        %1197 = vmatpush1.bf16.msra.mxu0 %v995
        %1198 = vmatprep.subr.bf16.mxu0 0
        %1199 = vmatpush1.bf16.msra.mxu0 %v996
        %1200 = vmatprep.subr.bf16.mxu0 0
        %1201 = vmatpush1.bf16.msra.mxu0 %v997
        %1202 = vmatprep.subr.bf16.mxu0 0
        %1203 = vmatpush1.bf16.msra.mxu0 %v998
        %1204 = vmatprep.subr.bf16.mxu0 0
        %1205 = vmatpush1.bf16.msra.mxu0 %v999
        %1206 = vmatprep.subr.bf16.mxu0 0
        %1207 = vmatpush1.bf16.msra.mxu0 %v1000
        %1208 = vmatprep.subr.bf16.mxu0 0
        %1209 = vmatpush1.bf16.msra.mxu0 %v1001
        %1210 = vmatprep.subr.bf16.mxu0 0
        %1211 = vmatpush1.bf16.msra.mxu0 %v1002
        %1212 = vmatprep.mubr.bf16.mxu0 %v638
        %1213 = vmatmul.mubr.bf16.gmra.mrb[0].mxu0 %v637
        %v1214 = vpop.f32.mrb[0].mxu0
        %v1215 = vadd.f32 %v1118, %v1214
        %v1216 = vpop.f32.mrb[0].mxu0
        %v1217 = vpop.f32.mrb[0].mxu0
        %v1218 = vadd.f32 %v1121, %v1217
        %v1219 = vpop.f32.mrb[0].mxu0
        %1220 = vmatprep.mubr.bf16.mxu0 %v645
        %1221 = vmatmul.mubr.bf16.gmra.mrb[0].mxu0 %v644
        %v1222 = vpop.f32.mrb[0].mxu0
        %v1223 = vadd.f32 %v1126, %v1222
        %v1224 = vpop.f32.mrb[0].mxu0
        %v1225 = vpop.f32.mrb[0].mxu0
        %v1226 = vadd.f32 %v1129, %v1225
        %v1227 = vpop.f32.mrb[0].mxu0
        %1228 = vmatprep.mubr.bf16.mxu0 %v652
        %1229 = vmatmul.mubr.bf16.gmra.mrb[0].mxu0 %v651
        %v1230 = vpop.f32.mrb[0].mxu0
        %v1231 = vadd.f32 %v1134, %v1230
        %v1232 = vpop.f32.mrb[0].mxu0
        %v1233 = vpop.f32.mrb[0].mxu0
        %v1234 = vadd.f32 %v1137, %v1233
        %v1235 = vpop.f32.mrb[0].mxu0
        %1236 = vmatprep.mubr.bf16.mxu0 %v659
        %1237 = vmatmul.mubr.bf16.gmra.mrb[0].mxu0 %v658
        %v1238 = vpop.f32.mrb[0].mxu0
        %v1239 = vadd.f32 %v1142, %v1238
        %v1240 = vpop.f32.mrb[0].mxu0
        %v1241 = vpop.f32.mrb[0].mxu0
        %v1242 = vadd.f32 %v1145, %v1241
        %v1243 = vpop.f32.mrb[0].mxu0
        %1244 = vmatprep.mubr.bf16.mxu0 %v666
        %1245 = vmatmul.mubr.bf16.gmra.mrb[0].mxu0 %v665
        %v1246 = vpop.f32.mrb[0].mxu0
        %v1247 = vadd.f32 %v1150, %v1246
        %v1248 = vpop.f32.mrb[0].mxu0
        %v1249 = vpop.f32.mrb[0].mxu0
        %v1250 = vadd.f32 %v1153, %v1249
        %v1251 = vpop.f32.mrb[0].mxu0
        %1252 = vmatprep.mubr.bf16.mxu0 %v673
        %1253 = vmatmul.mubr.bf16.gmra.mrb[0].mxu0 %v672
        %v1254 = vpop.f32.mrb[0].mxu0
        %v1255 = vadd.f32 %v1158, %v1254
        %v1256 = vpop.f32.mrb[0].mxu0
        %v1257 = vpop.f32.mrb[0].mxu0
        %v1258 = vadd.f32 %v1161, %v1257
        %v1259 = vpop.f32.mrb[0].mxu0
        %1260 = vmatprep.mubr.bf16.mxu0 %v680
        %1261 = vmatmul.mubr.bf16.gmra.mrb[0].mxu0 %v679
        %v1262 = vpop.f32.mrb[0].mxu0
        %v1263 = vadd.f32 %v1166, %v1262
        %v1264 = vpop.f32.mrb[0].mxu0
        %v1265 = vpop.f32.mrb[0].mxu0
        %v1266 = vadd.f32 %v1169, %v1265
        %v1267 = vpop.f32.mrb[0].mxu0
        %1268 = vmatprep.mubr.bf16.mxu0 %v687
        %1269 = vmatmul.mubr.bf16.gmra.mrb[0].mxu0 %v686
        %v1270 = vpop.f32.mrb[0].mxu0
        %v1271 = vadd.f32 %v1174, %v1270
        %v1272 = vpop.f32.mrb[0].mxu0
        %v1273 = vpop.f32.mrb[0].mxu0
        %v1274 = vadd.f32 %v1177, %v1273
        %v1275 = vpop.f32.mrb[0].mxu0
        %1276 = vdwg.mxu0
        %1277 = vmatprep.subr.bf16.mxu0 0
        %1278 = vmatpush1.bf16.msra.mxu0 %v1003
        %1279 = vmatprep.subr.bf16.mxu0 0
        %1280 = vmatpush1.bf16.msra.mxu0 %v1004
        %1281 = vmatprep.subr.bf16.mxu0 0
        %1282 = vmatpush1.bf16.msra.mxu0 %v1005
        %1283 = vmatprep.subr.bf16.mxu0 0
        %1284 = vmatpush1.bf16.msra.mxu0 %v1006
        %1285 = vmatprep.subr.bf16.mxu0 0
        %1286 = vmatpush1.bf16.msra.mxu0 %v1007
        %1287 = vmatprep.subr.bf16.mxu0 0
        %1288 = vmatpush1.bf16.msra.mxu0 %v1008
        %1289 = vmatprep.subr.bf16.mxu0 0
        %1290 = vmatpush1.bf16.msra.mxu0 %v1009
        %1291 = vmatprep.subr.bf16.mxu0 0
        %1292 = vmatpush1.bf16.msra.mxu0 %v1010
        %1293 = vmatprep.subr.bf16.mxu0 0
        %1294 = vmatpush1.bf16.msra.mxu0 %v1011
        %1295 = vmatprep.subr.bf16.mxu0 0
        %1296 = vmatpush1.bf16.msra.mxu0 %v1012
        %1297 = vmatprep.subr.bf16.mxu0 0
        %1298 = vmatpush1.bf16.msra.mxu0 %v1013
        %1299 = vmatprep.subr.bf16.mxu0 0
        %1300 = vmatpush1.bf16.msra.mxu0 %v1014
        %1301 = vmatprep.subr.bf16.mxu0 0
        %1302 = vmatpush1.bf16.msra.mxu0 %v1015
        %1303 = vmatprep.subr.bf16.mxu0 0
        %1304 = vmatpush1.bf16.msra.mxu0 %v1016
        %1305 = vmatprep.subr.bf16.mxu0 0
        %1306 = vmatpush1.bf16.msra.mxu0 %v1017
        %1307 = vmatprep.subr.bf16.mxu0 0
        %1308 = vmatpush1.bf16.msra.mxu0 %v1018
        %1309 = vmatprep.mubr.bf16.mxu0 %v640
        %1310 = vmatmul.mubr.bf16.gmra.mrb[0].mxu0 %v639
        %v1311 = vpop.f32.mrb[0].mxu0
        %v1312 = vadd.f32 %v1215, %v1311
        %v1313 = vpop.f32.mrb[0].mxu0
        %v1314 = vpop.f32.mrb[0].mxu0
        %v1315 = vadd.f32 %v1218, %v1314
        %v1316 = vpop.f32.mrb[0].mxu0
        %1317 = vmatprep.mubr.bf16.mxu0 %v647
        %1318 = vmatmul.mubr.bf16.gmra.mrb[0].mxu0 %v646
        %v1319 = vpop.f32.mrb[0].mxu0
        %v1320 = vadd.f32 %v1223, %v1319
        %v1321 = vpop.f32.mrb[0].mxu0
        %v1322 = vpop.f32.mrb[0].mxu0
        %v1323 = vadd.f32 %v1226, %v1322
        %v1324 = vpop.f32.mrb[0].mxu0
        %1325 = vmatprep.mubr.bf16.mxu0 %v654
        %1326 = vmatmul.mubr.bf16.gmra.mrb[0].mxu0 %v653
        %v1327 = vpop.f32.mrb[0].mxu0
        %v1328 = vadd.f32 %v1231, %v1327
        %v1329 = vpop.f32.mrb[0].mxu0
        %v1330 = vpop.f32.mrb[0].mxu0
        %v1331 = vadd.f32 %v1234, %v1330
        %v1332 = vpop.f32.mrb[0].mxu0
        %1333 = vmatprep.mubr.bf16.mxu0 %v661
        %1334 = vmatmul.mubr.bf16.gmra.mrb[0].mxu0 %v660
        %v1335 = vpop.f32.mrb[0].mxu0
        %v1336 = vadd.f32 %v1239, %v1335
        %v1337 = vpop.f32.mrb[0].mxu0
        %v1338 = vpop.f32.mrb[0].mxu0
        %v1339 = vadd.f32 %v1242, %v1338
        %v1340 = vpop.f32.mrb[0].mxu0
        %1341 = vmatprep.mubr.bf16.mxu0 %v668
        %1342 = vmatmul.mubr.bf16.gmra.mrb[0].mxu0 %v667
        %v1343 = vpop.f32.mrb[0].mxu0
        %v1344 = vadd.f32 %v1247, %v1343
        %v1345 = vpop.f32.mrb[0].mxu0
        %v1346 = vpop.f32.mrb[0].mxu0
        %v1347 = vadd.f32 %v1250, %v1346
        %v1348 = vpop.f32.mrb[0].mxu0
        %1349 = vmatprep.mubr.bf16.mxu0 %v675
        %1350 = vmatmul.mubr.bf16.gmra.mrb[0].mxu0 %v674
        %v1351 = vpop.f32.mrb[0].mxu0
        %v1352 = vadd.f32 %v1255, %v1351
        %v1353 = vpop.f32.mrb[0].mxu0
        %v1354 = vpop.f32.mrb[0].mxu0
        %v1355 = vadd.f32 %v1258, %v1354
        %v1356 = vpop.f32.mrb[0].mxu0
        %1357 = vmatprep.mubr.bf16.mxu0 %v682
        %1358 = vmatmul.mubr.bf16.gmra.mrb[0].mxu0 %v681
        %v1359 = vpop.f32.mrb[0].mxu0
        %v1360 = vadd.f32 %v1263, %v1359
        %v1361 = vpop.f32.mrb[0].mxu0
        %v1362 = vpop.f32.mrb[0].mxu0
        %v1363 = vadd.f32 %v1266, %v1362
        %v1364 = vpop.f32.mrb[0].mxu0
        %1365 = vmatprep.mubr.bf16.mxu0 %v689
        %1366 = vmatmul.mubr.bf16.gmra.mrb[0].mxu0 %v688
        %v1367 = vpop.f32.mrb[0].mxu0
        %v1368 = vadd.f32 %v1271, %v1367
        %v1369 = vpop.f32.mrb[0].mxu0
        %v1370 = vpop.f32.mrb[0].mxu0
        %v1371 = vadd.f32 %v1274, %v1370
        %v1372 = vpop.f32.mrb[0].mxu0
        %1373 = vdwg.mxu0
        %1374 = vmatprep.subr.bf16.mxu0 0
        %1375 = vmatpush1.bf16.msra.mxu0 %v1019
        %1376 = vmatprep.subr.bf16.mxu0 0
        %1377 = vmatpush1.bf16.msra.mxu0 %v1020
        %1378 = vmatprep.subr.bf16.mxu0 0
        %1379 = vmatpush1.bf16.msra.mxu0 %v1021
        %1380 = vmatprep.subr.bf16.mxu0 0
        %1381 = vmatpush1.bf16.msra.mxu0 %v1022
        %1382 = vmatprep.subr.bf16.mxu0 0
        %1383 = vmatpush1.bf16.msra.mxu0 %v1023
        %1384 = vmatprep.subr.bf16.mxu0 0
        %1385 = vmatpush1.bf16.msra.mxu0 %v1024
        %1386 = vmatprep.subr.bf16.mxu0 0
        %1387 = vmatpush1.bf16.msra.mxu0 %v1025
        %1388 = vmatprep.subr.bf16.mxu0 0
        %1389 = vmatpush1.bf16.msra.mxu0 %v1026
        %1390 = vmatprep.subr.bf16.mxu0 0
        %1391 = vmatpush1.bf16.msra.mxu0 0
        %1392 = vmatprep.subr.bf16.mxu0 0
        %1393 = vmatpush1.bf16.msra.mxu0 0
        %1394 = vmatprep.subr.bf16.mxu0 0
        %1395 = vmatpush1.bf16.msra.mxu0 0
        %1396 = vmatprep.subr.bf16.mxu0 0
        %1397 = vmatpush1.bf16.msra.mxu0 0
        %1398 = vmatprep.subr.bf16.mxu0 0
        %1399 = vmatpush1.bf16.msra.mxu0 0
        %1400 = vmatprep.subr.bf16.mxu0 0
        %1401 = vmatpush1.bf16.msra.mxu0 0
        %1402 = vmatprep.subr.bf16.mxu0 0
        %1403 = vmatpush1.bf16.msra.mxu0 0
        %1404 = vmatprep.subr.bf16.mxu0 0
        %1405 = vmatpush1.bf16.msra.mxu0 0
        %1406 = vmatprep.mubr.bf16.mxu0 0
        %1407 = vmatmul.mubr.bf16.gmra.mrb[0].mxu0 %v641
        %v1408 = vpop.f32.mrb[0].mxu0
        %v1409 = vadd.f32 %v1312, %v1408
        %v1410 = vpop.f32.mrb[0].mxu0
        %v1411 = vpop.f32.mrb[0].mxu0
        %v1412 = vadd.f32 %v1315, %v1411
        %v1413 = vpop.f32.mrb[0].mxu0
        %1414 = vmatprep.mubr.bf16.mxu0 0
        %1415 = vmatmul.mubr.bf16.gmra.mrb[0].mxu0 %v648
        %v1416 = vpop.f32.mrb[0].mxu0
        %v1417 = vadd.f32 %v1320, %v1416
        %v1418 = vpop.f32.mrb[0].mxu0
        %v1419 = vpop.f32.mrb[0].mxu0
        %v1420 = vadd.f32 %v1323, %v1419
        %v1421 = vpop.f32.mrb[0].mxu0
        %1422 = vmatprep.mubr.bf16.mxu0 0
        %1423 = vmatmul.mubr.bf16.gmra.mrb[0].mxu0 %v655
        %v1424 = vpop.f32.mrb[0].mxu0
        %v1425 = vadd.f32 %v1328, %v1424
        %v1426 = vpop.f32.mrb[0].mxu0
        %v1427 = vpop.f32.mrb[0].mxu0
        %v1428 = vadd.f32 %v1331, %v1427
        %v1429 = vpop.f32.mrb[0].mxu0
        %1430 = vmatprep.mubr.bf16.mxu0 0
        %1431 = vmatmul.mubr.bf16.gmra.mrb[0].mxu0 %v662
        %v1432 = vpop.f32.mrb[0].mxu0
        %v1433 = vadd.f32 %v1336, %v1432
        %v1434 = vpop.f32.mrb[0].mxu0
        %v1435 = vpop.f32.mrb[0].mxu0
        %v1436 = vadd.f32 %v1339, %v1435
        %v1437 = vpop.f32.mrb[0].mxu0
        %1438 = vmatprep.mubr.bf16.mxu0 0
        %1439 = vmatmul.mubr.bf16.gmra.mrb[0].mxu0 %v669
        %v1440 = vpop.f32.mrb[0].mxu0
        %v1441 = vadd.f32 %v1344, %v1440
        %v1442 = vpop.f32.mrb[0].mxu0
        %v1443 = vpop.f32.mrb[0].mxu0
        %v1444 = vadd.f32 %v1347, %v1443
        %v1445 = vpop.f32.mrb[0].mxu0
        %1446 = vmatprep.mubr.bf16.mxu0 0
        %1447 = vmatmul.mubr.bf16.gmra.mrb[0].mxu0 %v676
        %v1448 = vpop.f32.mrb[0].mxu0
        %v1449 = vadd.f32 %v1352, %v1448
        %v1450 = vpop.f32.mrb[0].mxu0
        %v1451 = vpop.f32.mrb[0].mxu0
        %v1452 = vadd.f32 %v1355, %v1451
        %v1453 = vpop.f32.mrb[0].mxu0
        %1454 = vmatprep.mubr.bf16.mxu0 0
        %1455 = vmatmul.mubr.bf16.gmra.mrb[0].mxu0 %v683
        %v1456 = vpop.f32.mrb[0].mxu0
        %v1457 = vadd.f32 %v1360, %v1456
        %v1458 = vpop.f32.mrb[0].mxu0
        %v1459 = vpop.f32.mrb[0].mxu0
        %v1460 = vadd.f32 %v1363, %v1459
        %v1461 = vpop.f32.mrb[0].mxu0
        %1462 = vmatprep.mubr.bf16.mxu0 0
        %1463 = vmatmul.mubr.bf16.gmra.mrb[0].mxu0 %v690
        %v1464 = vpop.f32.mrb[0].mxu0
        %v1465 = vadd.f32 %v1368, %v1464
        %v1466 = vpop.f32.mrb[0].mxu0
        %v1467 = vpop.f32.mrb[0].mxu0
        %v1468 = vadd.f32 %v1371, %v1467
        %v1469 = vpop.f32.mrb[0].mxu0
        %1470 = vdwg.mxu0
        %v1471 = vmax.f32 %v1409, 0.0
        %v1472 = vmax.f32 %v1412, 0.0
        %v1473 = vmax.f32 %v1417, 0.0
        %v1474 = vmax.f32 %v1420, 0.0
        %v1475 = vmax.f32 %v1425, 0.0
        %v1476 = vmax.f32 %v1428, 0.0
        %v1477 = vmax.f32 %v1433, 0.0
        %v1478 = vmax.f32 %v1436, 0.0
        %v1479 = vmax.f32 %v1441, 0.0
        %v1480 = vmax.f32 %v1444, 0.0
        %v1481 = vmax.f32 %v1449, 0.0
        %v1482 = vmax.f32 %v1452, 0.0
        %v1483 = vmax.f32 %v1457, 0.0
        %v1484 = vmax.f32 %v1460, 0.0
        %v1485 = vmax.f32 %v1465, 0.0
        %v1486 = vmax.f32 %v1468, 0.0
        %v1487 = vpack.c.bf16 %v1472, %v1471
        %v1488 = vpack.c.bf16 %v1474, %v1473
        %v1489 = vpack.c.bf16 %v1476, %v1475
        %v1490 = vpack.c.bf16 %v1478, %v1477
        %v1491 = vpack.c.bf16 %v1480, %v1479
        %v1492 = vpack.c.bf16 %v1482, %v1481
        %v1493 = vpack.c.bf16 %v1484, %v1483
        %v1494 = vpack.c.bf16 %v1486, %v1485
        %v1495 = vld [vmem:[#allocation7] sm:$0xf]
        %v1496 = vld [vmem:[#allocation7 + $0x4] sm:$0xf]
        %v1497 = vld [vmem:[#allocation7 + $0x8] sm:$0xf]
        %v1498 = vld [vmem:[#allocation7 + $0xc] sm:$0xf]
        %v1499 = vld [vmem:[#allocation7 + $0x10] sm:$0xf]
        %v1500 = vld [vmem:[#allocation7 + $0x14] sm:$0xf]
        %v1501 = vld [vmem:[#allocation7 + $0x18] sm:$0xf]
        %v1502 = vld [vmem:[#allocation7 + $0x1c] sm:$0xf]
        %v1503 = vld [vmem:[#allocation7 + $0x20] sm:$0xf]
        %v1504 = vld [vmem:[#allocation7 + $0x24] sm:$0xf]
        %v1505 = vld [vmem:[#allocation7 + $0x28] sm:$0xf]
        %v1506 = vld [vmem:[#allocation7 + $0x2c] sm:$0xf]
        %v1507 = vld [vmem:[#allocation7 + $0x30] sm:$0xf]
        %v1508 = vld [vmem:[#allocation7 + $0x34] sm:$0xf]
        %v1509 = vld [vmem:[#allocation7 + $0x38] sm:$0xf]
        %v1510 = vld [vmem:[#allocation7 + $0x3c] sm:$0xf]
        %v1511 = vld [vmem:[%s4] sm:$0x1]
        %v1513 = vlaneseq
        %v1514 = vshrl.u32 %v1513, 7
        %v1515 = vsub.s32 0, %v1514
        %v1516 = vrot.slane %v1511, %v1515
        %v1534 = vunpack.c.l.b16 %v1495
        %v1535 = vunpack.c.l.b16 %v1496
        %v1536 = vunpack.c.l.b16 %v1497
        %v1537 = vunpack.c.l.b16 %v1498
        %v1538 = vunpack.c.l.b16 %v1499
        %v1539 = vunpack.c.l.b16 %v1500
        %v1540 = vunpack.c.l.b16 %v1501
        %v1541 = vunpack.c.l.b16 %v1502
        %v1542 = vunpack.c.l.b16 %v1503
        %v1543 = vunpack.c.l.b16 %v1504
        %v1544 = vunpack.c.l.b16 %v1505
        %v1545 = vunpack.c.l.b16 %v1506
        %v1546 = vunpack.c.l.b16 %v1507
        %v1547 = vunpack.c.l.b16 %v1508
        %v1548 = vunpack.c.l.b16 %v1509
        %v1549 = vunpack.c.l.b16 %v1510
        %v1550 = vpack.c.b16 %v1535, %v1534
        %v1551 = vpack.c.b16 %v1537, %v1536
        %v1552 = vpack.c.b16 %v1539, %v1538
        %v1553 = vpack.c.b16 %v1541, %v1540
        %v1554 = vpack.c.b16 %v1543, %v1542
        %v1555 = vpack.c.b16 %v1545, %v1544
        %v1556 = vpack.c.b16 %v1547, %v1546
        %v1557 = vpack.c.b16 %v1549, %v1548
        %1566 = vmatprep.subr.bf16.mxu0 0
        %1567 = vmatpush1.bf16.msra.mxu0 %v1550
        %1568 = vmatprep.subr.bf16.mxu0 0
        %1569 = vmatpush1.bf16.msra.mxu0 %v1551
        %1570 = vmatprep.subr.bf16.mxu0 0
        %1571 = vmatpush1.bf16.msra.mxu0 %v1552
        %1572 = vmatprep.subr.bf16.mxu0 0
        %1573 = vmatpush1.bf16.msra.mxu0 %v1553
        %1574 = vmatprep.subr.bf16.mxu0 0
        %1575 = vmatpush1.bf16.msra.mxu0 %v1554
        %1576 = vmatprep.subr.bf16.mxu0 0
        %1577 = vmatpush1.bf16.msra.mxu0 %v1555
        %1578 = vmatprep.subr.bf16.mxu0 0
        %1579 = vmatpush1.bf16.msra.mxu0 %v1556
        %1580 = vmatprep.subr.bf16.mxu0 0
        %1581 = vmatpush1.bf16.msra.mxu0 %v1557
        %1582 = vmatprep.subr.bf16.mxu0 0
        %1583 = vmatpush1.bf16.msra.mxu0 0
        %1584 = vmatprep.subr.bf16.mxu0 0
        %1585 = vmatpush1.bf16.msra.mxu0 0
        %1586 = vmatprep.subr.bf16.mxu0 0
        %1587 = vmatpush1.bf16.msra.mxu0 0
        %1588 = vmatprep.subr.bf16.mxu0 0
        %1589 = vmatpush1.bf16.msra.mxu0 0
        %1590 = vmatprep.subr.bf16.mxu0 0
        %1591 = vmatpush1.bf16.msra.mxu0 0
        %1592 = vmatprep.subr.bf16.mxu0 0
        %1593 = vmatpush1.bf16.msra.mxu0 0
        %1594 = vmatprep.subr.bf16.mxu0 0
        %1595 = vmatpush1.bf16.msra.mxu0 0
        %1596 = vmatprep.subr.bf16.mxu0 0
        %1597 = vmatpush1.bf16.msra.mxu0 0
        %1598 = vmatprep.mubr.bf16.mxu0 0
        %1599 = vmatmul.mubr.bf16.gmra.mrb[0].mxu0 %v1487
        %v1600 = vpop.f32.mrb[0].mxu0
        %v1601 = vadd.f32 %v1516, %v1600
        %v1602 = vpop.f32.mrb[0].mxu0
        %v1603 = vpop.f32.mrb[0].mxu0
        %v1604 = vadd.f32 %v1516, %v1603
        %v1605 = vpop.f32.mrb[0].mxu0
        %1606 = vmatprep.mubr.bf16.mxu0 0
        %1607 = vmatmul.mubr.bf16.gmra.mrb[0].mxu0 %v1488
        %v1608 = vpop.f32.mrb[0].mxu0
        %v1609 = vadd.f32 %v1516, %v1608
        %v1610 = vpop.f32.mrb[0].mxu0
        %v1611 = vpop.f32.mrb[0].mxu0
        %v1612 = vadd.f32 %v1516, %v1611
        %v1613 = vpop.f32.mrb[0].mxu0
        %1614 = vmatprep.mubr.bf16.mxu0 0
        %1615 = vmatmul.mubr.bf16.gmra.mrb[0].mxu0 %v1489
        %v1616 = vpop.f32.mrb[0].mxu0
        %v1617 = vadd.f32 %v1516, %v1616
        %v1618 = vpop.f32.mrb[0].mxu0
        %v1619 = vpop.f32.mrb[0].mxu0
        %v1620 = vadd.f32 %v1516, %v1619
        %v1621 = vpop.f32.mrb[0].mxu0
        %1622 = vmatprep.mubr.bf16.mxu0 0
        %1623 = vmatmul.mubr.bf16.gmra.mrb[0].mxu0 %v1490
        %v1624 = vpop.f32.mrb[0].mxu0
        %v1625 = vadd.f32 %v1516, %v1624
        %v1626 = vpop.f32.mrb[0].mxu0
        %v1627 = vpop.f32.mrb[0].mxu0
        %v1628 = vadd.f32 %v1516, %v1627
        %v1629 = vpop.f32.mrb[0].mxu0
        %1630 = vmatprep.mubr.bf16.mxu0 0
        %1631 = vmatmul.mubr.bf16.gmra.mrb[0].mxu0 %v1491
        %v1632 = vpop.f32.mrb[0].mxu0
        %v1633 = vadd.f32 %v1516, %v1632
        %v1634 = vpop.f32.mrb[0].mxu0
        %v1635 = vpop.f32.mrb[0].mxu0
        %v1636 = vadd.f32 %v1516, %v1635
        %v1637 = vpop.f32.mrb[0].mxu0
        %1638 = vmatprep.mubr.bf16.mxu0 0
        %1639 = vmatmul.mubr.bf16.gmra.mrb[0].mxu0 %v1492
        %v1640 = vpop.f32.mrb[0].mxu0
        %v1641 = vadd.f32 %v1516, %v1640
        %v1642 = vpop.f32.mrb[0].mxu0
        %v1643 = vpop.f32.mrb[0].mxu0
        %v1644 = vadd.f32 %v1516, %v1643
        %v1645 = vpop.f32.mrb[0].mxu0
        %1646 = vmatprep.mubr.bf16.mxu0 0
        %1647 = vmatmul.mubr.bf16.gmra.mrb[0].mxu0 %v1493
        %v1648 = vpop.f32.mrb[0].mxu0
        %v1649 = vadd.f32 %v1516, %v1648
        %v1650 = vpop.f32.mrb[0].mxu0
        %v1651 = vpop.f32.mrb[0].mxu0
        %v1652 = vadd.f32 %v1516, %v1651
        %v1653 = vpop.f32.mrb[0].mxu0
        %1654 = vmatprep.mubr.bf16.mxu0 0
        %1655 = vmatmul.mubr.bf16.gmra.mrb[0].mxu0 %v1494
        %v1656 = vpop.f32.mrb[0].mxu0
        %v1657 = vadd.f32 %v1516, %v1656
        %v1658 = vpop.f32.mrb[0].mxu0
        %v1659 = vpop.f32.mrb[0].mxu0
        %v1660 = vadd.f32 %v1516, %v1659
        %v1661 = vpop.f32.mrb[0].mxu0
        %1662 = vdwg.mxu0
        %1663 = vst [vmem:[%s272] sm:$0xff] %v1601
        %1664 = vst [vmem:[%s272 + $0x8] sm:$0xff] %v1604
        %1665 = vst [vmem:[%s272 + $0x10] sm:$0xff] %v1609
        %1666 = vst [vmem:[%s272 + $0x18] sm:$0xff] %v1612
        %1667 = vst [vmem:[%s272 + $0x20] sm:$0xff] %v1617
        %1668 = vst [vmem:[%s272 + $0x28] sm:$0xff] %v1620
        %1669 = vst [vmem:[%s272 + $0x30] sm:$0xff] %v1625
        %1670 = vst [vmem:[%s272 + $0x38] sm:$0xff] %v1628
        %1671 = vst [vmem:[%s272 + $0x40] sm:$0xff] %v1633
        %1672 = vst [vmem:[%s272 + $0x48] sm:$0xff] %v1636
        %1673 = vst [vmem:[%s272 + $0x50] sm:$0xff] %v1641
        %1674 = vst [vmem:[%s272 + $0x58] sm:$0xff] %v1644
        %1675 = vst [vmem:[%s272 + $0x60] sm:$0xff] %v1649
        %1676 = vst [vmem:[%s272 + $0x68] sm:$0xff] %v1652
        %1677 = vst [vmem:[%s272 + $0x70] sm:$0xff] %v1657
        %1678 = vst [vmem:[%s272 + $0x78] sm:$0xff] %v1660
        %s1679 = sand.u32 %s141, 1
        %s1680 = scalar_lea.sflag [#allocation4], %s1679
        %s1681 = sand.u32 %s141, 1
        %s1682 = smul.addr %s1681, 128
        %s1683 = scalar_lea.vmem [#allocation8], %s1682
        // Predicated region
        $region53: #{tpu_custom_call.1} parent=39 // pred_check
          %p1684 = pneg %p151
        $region54: #{tpu_custom_call.1} parent=39 // pred_check_branch
          %1686 = sbr.rel (%p1684) target = $region56
        $region55: #{tpu_custom_call.1} parent=39 // pred_region
          %s1687 = smul.u32 16, %s23
          %s1689 = ssub.s32 2048, 2048
          %1690 = vsyncadd %s1680, %s1689
          %s1691 = smul.addr %s1687, 128
          %s1692 = scalar_lea.hbm %s5, %s1691
          %s1693 = sshll.u32 %s1683, 4
          %s1694 = int_to_ptr.vmem [resolvable:$true] %s1693
          %1699 = dma.vmem_to_hbm [thread:$0]  %s1694, 2048, %s1692, %s1680, 128, 128, 8
        $region56: #{tpu_custom_call.1} parent=39 // pred_fallthru
          _
      $region40: #{tpu_custom_call.1} parent=5 // pred_fallthru
        _
      %p1700 = scmp.le.s32.totalorder 2, %s18
      // Predicated region
      $region57: #{tpu_custom_call.1} parent=5 // pred_check
        %p1701 = pneg %p1700
      $region58: #{tpu_custom_call.1} parent=5 // pred_check_branch
        %1703 = sbr.rel (%p1701) target = $region60
      $region59: #{tpu_custom_call.1} parent=5 // pred_region
        %s1704 = ssub.s32 %s18, 2
        // Predicated region
        $region61: #{tpu_custom_call.1} parent=59 // pred_check
          %p1705 = pneg %p157
        $region62: #{tpu_custom_call.1} parent=59 // pred_check_branch
          %1707 = sbr.rel (%p1705) target = $region64
        $region63: #{tpu_custom_call.1} parent=59 // pred_region
          %s1708 = sand.u32 %s142, 1
          %s1709 = scalar_lea.sflag [#allocation4], %s1708
          %s1710 = sand.u32 %s142, 1
          %s1711 = smul.addr %s1710, 128
          %s1712 = scalar_lea.vmem [#allocation8], %s1711
          %1713 = dma.done %s1709, 2048
        $region64: #{tpu_custom_call.1} parent=59 // pred_fallthru
          _
      $region60: #{tpu_custom_call.1} parent=5 // pred_fallthru
        _
    $region6: #{tpu_custom_call.1} parent=1 // loop_footer
      %s22 = sadd.s32 1, %s18
    $region7: #{tpu_custom_call.1} parent=1 // loop_footer_branch
      %17 = sbr.rel target = $region3
    $region8: #{tpu_custom_call.1} parent=1 // loop_exit
      _
    %1714 = vsyncpa [#allocation3], 1
    %s1715 = scalar_lea.sflag [#allocation3], 1
    %1716 = vsyncpa %s1715, 1
    %1717 = vsyncpa [#allocation6], 1
    %1718 = vsyncpa [#allocation4], 1
    %s1719 = scalar_lea.sflag [#allocation4], 1
    %1720 = vsyncpa %s1719, 1

</llo_original>
